<compile_context>
chip_gen: v6e
topology: v6e:2x2x1
jax: 0.10.0
libtpu: 0.0.40
codegen_flags: <defaults>
</compile_context>

<pallas_src>
import functools
import math

import jax
import jax.numpy as jnp
from jax.experimental import pallas as pl
from jax.experimental.pallas import tpu as pltpu


# ----------------------------- kernel ---------------------------------------


def _layer_norm(y, gamma, beta, eps=1e-5):
    mean = jnp.mean(y, axis=-1, keepdims=True)
    var = jnp.mean((y - mean) ** 2, axis=-1, keepdims=True)
    return (y - mean) * jax.lax.rsqrt(var + eps) * gamma + beta


def fft_block_kernel(lens_ref,                      # scalar prefetch (SMEM)
                     x_ref,
                     wqkv_ref, bqkv_ref, wo_ref, bo_ref,
                     g1_ref, be1_ref,
                     w1_ref, b1_ref, w2_ref, b2_ref,
                     g2_ref, be2_ref,
                     o_ref, *, n_heads):
    f32 = jnp.float32
    bf16 = jnp.bfloat16

    b = pl.program_id(0)
    seq_len = lens_ref[b]                           # valid length of this batch row

    x = x_ref[0]                                    # (T, H) f32
    T, H = x.shape
    d_hid = H // n_heads
    kk = w1_ref.shape[0]                            # conv kernel size (odd)
    pad = kk // 2

    # ---- attention mask built in-kernel from the sequence length (hoisted,
    #      shared by all heads; matches QK[~mask] = -1e9 semantics) ----
    qi = jax.lax.broadcasted_iota(jnp.int32, (T, T), 0)
    ki = jax.lax.broadcasted_iota(jnp.int32, (T, T), 1)
    valid2d = (qi < seq_len) & (ki < seq_len)       # (T, T) bool

    # ---- fused QKV projection: one bf16 matmul, f32 accumulate.
    #      1/sqrt(d_model) is already folded into the Q weights/bias. ----
    x_bf = x.astype(bf16)
    qkv = jnp.dot(x_bf, wqkv_ref[...], preferred_element_type=f32) + bqkv_ref[...]
    # column layout: [ Q (all heads) | K (all heads) | V (all heads) ]

    heads = []
    for h in range(n_heads):
        lo, hi = h * d_hid, (h + 1) * d_hid
        q = qkv[:, lo:hi]
        k = qkv[:, H + lo:H + hi]
        v = qkv[:, 2 * H + lo:2 * H + hi]

        s = jnp.dot(q.astype(bf16), k.astype(bf16).T, preferred_element_type=f32)
        s = jnp.where(valid2d, s, -1e9)             # masking/softmax stats in f32
        m = jnp.max(s, axis=-1, keepdims=True)
        e = jnp.exp(s - m)
        denom = jnp.sum(e, axis=-1, keepdims=True)
        # normalize AFTER the (T,T)x(T,d) matmul: (T,1) reciprocal on the EUP
        # and a (T,d) multiply instead of a (T,T) divide.
        head_un = jnp.dot(e.astype(bf16), v.astype(bf16), preferred_element_type=f32)
        heads.append(head_un * pl.reciprocal(denom, approx=True))

    # ---- output projection ----
    if d_hid % 128 == 0 and n_heads > 1:
        # lane-aligned heads: assemble concat(heads) and do one deep-K matmul.
        att_in = jnp.concatenate(heads, axis=-1).astype(bf16)
        att = jnp.dot(att_in, wo_ref[...], preferred_element_type=f32)
    else:
        # unaligned d_hid: avoid lane relayout, accumulate per head
        # (concat(heads) @ Wo == sum_h head_h @ Wo[h*d : (h+1)*d, :]).
        att = jnp.zeros((T, H), f32)
        for h in range(n_heads):
            wo_h = wo_ref[h * d_hid:(h + 1) * d_hid, :]
            att = att + jnp.dot(heads[h].astype(bf16), wo_h,
                                preferred_element_type=f32)
    att = att + bo_ref[...]

    # ---- add & norm 1 ----
    # TODO(synk): nn.Dropout is identity here (eval/inference semantics).
    y1 = _layer_norm(att + x, g1_ref[...], be1_ref[...])

    # ---- conv1d('same') -> ReLU -> conv1d('same'), as per-tap matmuls ----
    # tap validity masks hoisted once and shared by both convs.
    t_idx = jax.lax.broadcasted_iota(jnp.int32, (T, 1), 0)
    tap_valid = [((t_idx + (j - pad)) >= 0) & ((t_idx + (j - pad)) < T)
                 for j in range(kk)]

    def conv_same(inp, w_ref, b_ref):
        cout = w_ref.shape[2]
        acc = jnp.zeros((T, cout), f32)
        for j in range(kk):
            off = j - pad
            if off == 0:
                tap = inp.astype(bf16)
            else:
                # rolled[t] = inp[(t + off) % T]; out-of-range rows zeroed.
                rolled = pltpu.roll(inp, shift=(-off) % T, axis=0)
                tap = jnp.where(tap_valid[j], rolled, 0.0).astype(bf16)
            acc = acc + jnp.dot(tap, w_ref[j], preferred_element_type=f32)
        return acc + b_ref[...]

    h1 = jnp.maximum(conv_same(y1, w1_ref, b1_ref), 0.0)
    h2 = conv_same(h1, w2_ref, b2_ref)

    # ---- add & norm 2 ----
    o_ref[0] = _layer_norm(h2 + y1, g2_ref[...], be2_ref[...])


# --------------------------- wrapper / params --------------------------------


def make_params(key, n_heads, hidden, kernel_size, filter_size):
    """Canonical f32 per-head parameters (used directly by the reference)."""
    d_hid = hidden // n_heads
    ks = jax.random.split(key, 12)

    def init(k, shape, scale=0.1):
        return (scale * jax.random.normal(k, shape)).astype(jnp.float32)

    return dict(
        wq=init(ks[0], (n_heads, hidden, d_hid)),
        bq=init(ks[1], (n_heads, 1, d_hid)),
        wk=init(ks[2], (n_heads, hidden, d_hid)),
        bk=init(ks[3], (n_heads, 1, d_hid)),
        wv=init(ks[4], (n_heads, hidden, d_hid)),
        bv=init(ks[5], (n_heads, 1, d_hid)),
        # wo per-head: (n_heads, d_hid, hidden) == (hidden,hidden) projection
        # applied to concat(heads).
        wo=init(ks[6], (n_heads, d_hid, hidden)),
        bo=init(ks[7], (1, hidden)),
        g1=jnp.ones((1, hidden), jnp.float32),
        be1=jnp.zeros((1, hidden), jnp.float32),
        # conv weights stored as (kernel, in_ch, out_ch) so each tap is a matmul.
        w1=init(ks[8], (kernel_size, hidden, filter_size)),
        b1=init(ks[9], (1, filter_size)),
        w2=init(ks[10], (kernel_size, filter_size, hidden)),
        b2=init(ks[11], (1, hidden)),
        g2=jnp.ones((1, hidden), jnp.float32),
        be2=jnp.zeros((1, hidden), jnp.float32),
    )


def _prep_kernel_params(params):
    """Fuse QKV, fold the 1/sqrt(d_model) scale, flatten Wo, cast MXU weights
    to bf16 (biases / LayerNorm affine stay f32)."""
    nh, H, dh = params["wq"].shape
    scale = 1.0 / math.sqrt(H)
    bf16, f32 = jnp.bfloat16, jnp.float32

    def flat_w(w):    # (nh, H, dh) -> (H, nh*dh), head-major columns
        return jnp.transpose(w, (1, 0, 2)).reshape(H, nh * dh)

    def flat_b(bias):  # (nh, 1, dh) -> (1, nh*dh)
        return jnp.transpose(bias, (1, 0, 2)).reshape(1, nh * dh)

    wqkv = jnp.concatenate(
        [flat_w(params["wq"]) * scale, flat_w(params["wk"]), flat_w(params["wv"])],
        axis=-1).astype(bf16)                                   # (H, 3H)
    bqkv = jnp.concatenate(
        [flat_b(params["bq"]) * scale, flat_b(params["bk"]), flat_b(params["bv"])],
        axis=-1).astype(f32)                                    # (1, 3H)
    wo = params["wo"].reshape(nh * dh, H).astype(bf16)          # (H, H)

    plist = [
        wqkv, bqkv, wo, params["bo"].astype(f32),
        params["g1"].astype(f32), params["be1"].astype(f32),
        params["w1"].astype(bf16), params["b1"].astype(f32),
        params["w2"].astype(bf16), params["b2"].astype(f32),
        params["g2"].astype(f32), params["be2"].astype(f32),
    ]
    return plist, nh


def fft_block(x, lengths, params):
    B, T, H = x.shape
    kk = params["w1"].shape[0]
    assert T > kk // 2, "sequence length must exceed the conv half-width"
    plist, n_heads = _prep_kernel_params(params)
    filt = params["w1"].shape[2]

    def const_spec(arr):
        nd = arr.ndim
        return pl.BlockSpec(arr.shape, lambda b, lens, _nd=nd: (0,) * _nd)

    in_specs = ([pl.BlockSpec((1, T, H), lambda b, lens: (b, 0, 0))]
                + [const_spec(p) for p in plist])
    out_spec = pl.BlockSpec((1, T, H), lambda b, lens: (b, 0, 0))

    # Explicit VMEM budget: sized from the actual per-step footprint and
    # clamped so it stays within v7x's 64 MiB physical VMEM (48 MiB ceiling),
    # while raising v5e's 16 MiB default only as far as needed.
    def _nbytes(a):
        return int(a.size) * a.dtype.itemsize
    interm = 4 * (T * 3 * H + 3 * T * T + 4 * T * max(filt, H))   # f32 temps
    est = 2 * (2 * 4 * T * H) + 2 * sum(_nbytes(p) for p in plist) + interm
    vmem_limit = int(min(max(4 * est, 16 * 2 ** 20), 48 * 2 ** 20))

    kernel = functools.partial(fft_block_kernel, n_heads=n_heads)
    return pl.pallas_call(
        kernel,
        out_shape=jax.ShapeDtypeStruct((B, T, H), jnp.float32),
        grid_spec=pltpu.PrefetchScalarGridSpec(
            num_scalar_prefetch=1,        # lengths -> SMEM, no (T,T) mask DMA
            grid=(B,),
            in_specs=in_specs,
            out_specs=out_spec,
        ),
        compiler_params=pltpu.CompilerParams(
            dimension_semantics=("parallel",),
            vmem_limit_bytes=vmem_limit,
        ),
    )(lengths.astype(jnp.int32), x, *plist)


# ----------------------------- pure-JAX reference ----------------------------


def ref_fft_block(x, lengths, params):
    B, T, H = x.shape
    hp = "highest"

    valid = jnp.arange(T)[None, :] < lengths[:, None]                 # (B, T)
    maskf = valid[:, :, None] & valid[:, None, :]                     # (B, T, T)

    Q = jnp.einsum("btd,hdk->bhtk", x, params["wq"], precision=hp) + params["bq"][None]
    K = jnp.einsum("btd,hdk->bhtk", x, params["wk"], precision=hp) + params["bk"][None]
    V = jnp.einsum("btd,hdk->bhtk", x, params["wv"], precision=hp) + params["bv"][None]
    qk = jnp.einsum("bhqd,bhkd->bhqk", Q, K, precision=hp) / math.sqrt(H)
    qk = jnp.where(maskf[:, None], qk, -1e9)
    p = jax.nn.softmax(qk, axis=-1)
    heads = jnp.einsum("bhqk,bhkd->bhqd", p, V, precision=hp)
    att = jnp.einsum("bhtd,hdm->btm", heads, params["wo"], precision=hp) + params["bo"][0]

    y1 = _layer_norm(att + x, params["g1"][0], params["be1"][0])

    kk = params["w1"].shape[0]
    pad = kk // 2

    def conv_same(inp, w, b):
        xp = jnp.pad(inp, ((0, 0), (pad, pad), (0, 0)))
        acc = sum(jnp.einsum("btc,cf->btf", xp[:, j:j + T], w[j], precision=hp)
                  for j in range(kk))
        return acc + b[0]

    h1 = jnp.maximum(conv_same(y1, params["w1"], params["b1"]), 0.0)
    h2 = conv_same(h1, params["w2"], params["b2"])
    return _layer_norm(h2 + y1, params["g2"][0], params["be2"][0])


# --------------------------------- main ---------------------------------------


if __name__ == "__main__":
    B, T = 2, 8
    n_heads, hidden, kernel_size, filter_size = 2, 32, 3, 64

    key = jax.random.PRNGKey(0)
    kx, kp = jax.random.split(key)
    x = jax.random.normal(kx, (B, T, hidden), dtype=jnp.float32)

    # Padding-style lengths: batch 0 full length, batch 1 length T-2.
    lengths = jnp.array([T, T - 2], dtype=jnp.int32)

    params = make_params(kp, n_heads, hidden, kernel_size, filter_size)

    out = fft_block(x, lengths, params)
    jax.block_until_ready(out)

    ref = ref_fft_block(x, lengths, params)
    err = float(jnp.max(jnp.abs(out - ref)))
    # Kernel feeds the MXU bf16 with f32 accumulation (documented mixed-precision
    # numerics) while the reference runs f32 with precision='highest'.
    assert err < 5e-2, f"mismatch vs reference: max abs err = {err}"

    print("KERNEL_OK")
</pallas_src>

<mosaic_0001>
module attributes {stable_mosaic.version = 11 : i64} {
  func.func @fft_block_kernel(%arg0: i32, %arg1: memref<2xi32, #tpu.memory_space<smem>>, %arg2: memref<1x8x32xf32, #tpu.memory_space<vmem>>, %arg3: memref<32x96xbf16, #tpu.memory_space<vmem>>, %arg4: memref<1x96xf32, #tpu.memory_space<vmem>>, %arg5: memref<32x32xbf16, #tpu.memory_space<vmem>>, %arg6: memref<1x32xf32, #tpu.memory_space<vmem>>, %arg7: memref<1x32xf32, #tpu.memory_space<vmem>>, %arg8: memref<1x32xf32, #tpu.memory_space<vmem>>, %arg9: memref<3x32x64xbf16, #tpu.memory_space<vmem>>, %arg10: memref<1x64xf32, #tpu.memory_space<vmem>>, %arg11: memref<3x64x32xbf16, #tpu.memory_space<vmem>>, %arg12: memref<1x32xf32, #tpu.memory_space<vmem>>, %arg13: memref<1x32xf32, #tpu.memory_space<vmem>>, %arg14: memref<1x32xf32, #tpu.memory_space<vmem>>, %arg15: memref<1x8x32xf32, #tpu.memory_space<vmem>>) attributes {dimension_semantics = [#tpu.dimension_semantics<parallel>], iteration_bounds = array<i64: 2>, scalar_prefetch = 1 : i64, scratch_operands = 0 : i64, tpu.core_type = #tpu.core_type<tc>, window_params = [{transform_indices = @transform_0, window_bounds = array<i64: 1, 8, 32>}, {pipeline_mode = #tpu.pipeline_mode<synchronous>, transform_indices = @transform_1, window_bounds = array<i64: 32, 96>}, {pipeline_mode = #tpu.pipeline_mode<synchronous>, transform_indices = @transform_2, window_bounds = array<i64: 1, 96>}, {pipeline_mode = #tpu.pipeline_mode<synchronous>, transform_indices = @transform_3, window_bounds = array<i64: 32, 32>}, {pipeline_mode = #tpu.pipeline_mode<synchronous>, transform_indices = @transform_4, window_bounds = array<i64: 1, 32>}, {pipeline_mode = #tpu.pipeline_mode<synchronous>, transform_indices = @transform_5, window_bounds = array<i64: 1, 32>}, {pipeline_mode = #tpu.pipeline_mode<synchronous>, transform_indices = @transform_6, window_bounds = array<i64: 1, 32>}, {pipeline_mode = #tpu.pipeline_mode<synchronous>, transform_indices = @transform_7, window_bounds = array<i64: 3, 32, 64>}, {pipeline_mode = #tpu.pipeline_mode<synchronous>, transform_indices = @transform_8, window_bounds = array<i64: 1, 64>}, {pipeline_mode = #tpu.pipeline_mode<synchronous>, transform_indices = @transform_9, window_bounds = array<i64: 3, 64, 32>}, {pipeline_mode = #tpu.pipeline_mode<synchronous>, transform_indices = @transform_10, window_bounds = array<i64: 1, 32>}, {pipeline_mode = #tpu.pipeline_mode<synchronous>, transform_indices = @transform_11, window_bounds = array<i64: 1, 32>}, {pipeline_mode = #tpu.pipeline_mode<synchronous>, transform_indices = @transform_12, window_bounds = array<i64: 1, 32>}, {transform_indices = @transform_13, window_bounds = array<i64: 1, 8, 32>}]} {
    %0 = arith.index_cast %arg0 : i32 to index
    %1 = memref.load %arg1[%0] : memref<2xi32, #tpu.memory_space<smem>>
    %c0 = arith.constant 0 : index
    %c0_0 = arith.constant 0 : index
    %c0_1 = arith.constant 0 : index
    %2 = vector.load %arg2[%c0, %c0_0, %c0_1] : memref<1x8x32xf32, #tpu.memory_space<vmem>>, vector<1x8x32xf32>
    %3 = vector.shape_cast %2 : vector<1x8x32xf32> to vector<8x32xf32>
    %4 = tpu.iota {dimensions = array<i32: 0>} : vector<8x8xi32>
    %5 = tpu.iota {dimensions = array<i32: 1>} : vector<8x8xi32>
    %6 = vector.broadcast %1 : i32 to vector<8x8xi32>
    %7 = arith.cmpi slt, %4, %6 : vector<8x8xi32>
    %8 = vector.broadcast %1 : i32 to vector<8x8xi32>
    %9 = arith.cmpi slt, %5, %8 : vector<8x8xi32>
    %10 = arith.andi %7, %9 : vector<8x8xi1>
    %11 = arith.truncf %3 : vector<8x32xf32> to vector<8x32xbf16>
    %c0_2 = arith.constant 0 : index
    %c0_3 = arith.constant 0 : index
    %12 = vector.load %arg3[%c0_2, %c0_3] : memref<32x96xbf16, #tpu.memory_space<vmem>>, vector<32x96xbf16>
    %cst = arith.constant dense<0.000000e+00> : vector<8x96xf32>
    %13 = tpu.matmul %11, %12, %cst {dimension_numbers = #tpu.dot_dimension_numbers<[1], [0], [0], [1], [0, 0, 1, 1], [], []>} : vector<8x32xbf16>, vector<32x96xbf16>, vector<8x96xf32> -> vector<8x96xf32>
    %c0_4 = arith.constant 0 : index
    %c0_5 = arith.constant 0 : index
    %14 = vector.load %arg4[%c0_4, %c0_5] : memref<1x96xf32, #tpu.memory_space<vmem>>, vector<1x96xf32>
    %15 = vector.broadcast %14 : vector<1x96xf32> to vector<8x96xf32>
    %16 = arith.addf %13, %15 : vector<8x96xf32>
    %17 = vector.extract_strided_slice %16 {offsets = [0, 0], sizes = [8, 16], strides = [1, 1]} : vector<8x96xf32> to vector<8x16xf32>
    %18 = vector.extract_strided_slice %16 {offsets = [0, 32], sizes = [8, 16], strides = [1, 1]} : vector<8x96xf32> to vector<8x16xf32>
    %19 = vector.extract_strided_slice %16 {offsets = [0, 64], sizes = [8, 16], strides = [1, 1]} : vector<8x96xf32> to vector<8x16xf32>
    %20 = arith.truncf %17 : vector<8x16xf32> to vector<8x16xbf16>
    %21 = arith.truncf %18 : vector<8x16xf32> to vector<8x16xbf16>
    %22 = tpu.transpose %21, [1, 0] : vector<8x16xbf16> -> vector<16x8xbf16>
    %cst_6 = arith.constant dense<0.000000e+00> : vector<8x8xf32>
    %23 = tpu.matmul %20, %22, %cst_6 {dimension_numbers = #tpu.dot_dimension_numbers<[1], [0], [0], [1], [0, 0, 1, 1], [], []>} : vector<8x16xbf16>, vector<16x8xbf16>, vector<8x8xf32> -> vector<8x8xf32>
    %cst_7 = arith.constant -1.000000e+09 : f32
    %24 = vector.broadcast %cst_7 : f32 to vector<8x8xf32>
    %25 = arith.select %10, %23, %24 : vector<8x8xi1>, vector<8x8xf32>
    %cst_8 = arith.constant dense<0xFF800000> : vector<8xf32>
    %26 = vector.multi_reduction <maximumf>, %25, %cst_8 [1] : vector<8x8xf32> to vector<8xf32>
    %27 = vector.shape_cast %26 : vector<8xf32> to vector<8x1xf32>
    %28 = vector.broadcast %27 : vector<8x1xf32> to vector<8x8xf32>
    %29 = arith.subf %25, %28 : vector<8x8xf32>
    %30 = math.exp %29 : vector<8x8xf32>
    %cst_9 = arith.constant dense<0.000000e+00> : vector<8xf32>
    %31 = vector.multi_reduction <add>, %30, %cst_9 [1] : vector<8x8xf32> to vector<8xf32>
    %32 = vector.shape_cast %31 : vector<8xf32> to vector<8x1xf32>
    %33 = arith.truncf %30 : vector<8x8xf32> to vector<8x8xbf16>
    %34 = arith.truncf %19 : vector<8x16xf32> to vector<8x16xbf16>
    %cst_10 = arith.constant dense<0.000000e+00> : vector<8x16xf32>
    %35 = tpu.matmul %33, %34, %cst_10 {dimension_numbers = #tpu.dot_dimension_numbers<[1], [0], [0], [1], [0, 0, 1, 1], [], []>} : vector<8x8xbf16>, vector<8x16xbf16>, vector<8x16xf32> -> vector<8x16xf32>
    %36 = tpu.reciprocal %32 {approx = true} : vector<8x1xf32> -> vector<8x1xf32>
    %37 = vector.broadcast %36 : vector<8x1xf32> to vector<8x16xf32>
    %38 = arith.mulf %35, %37 : vector<8x16xf32>
    %39 = vector.extract_strided_slice %16 {offsets = [0, 16], sizes = [8, 16], strides = [1, 1]} : vector<8x96xf32> to vector<8x16xf32>
    %40 = vector.extract_strided_slice %16 {offsets = [0, 48], sizes = [8, 16], strides = [1, 1]} : vector<8x96xf32> to vector<8x16xf32>
    %41 = vector.extract_strided_slice %16 {offsets = [0, 80], sizes = [8, 16], strides = [1, 1]} : vector<8x96xf32> to vector<8x16xf32>
    %42 = arith.truncf %39 : vector<8x16xf32> to vector<8x16xbf16>
    %43 = arith.truncf %40 : vector<8x16xf32> to vector<8x16xbf16>
    %44 = tpu.transpose %43, [1, 0] : vector<8x16xbf16> -> vector<16x8xbf16>
    %cst_11 = arith.constant dense<0.000000e+00> : vector<8x8xf32>
    %45 = tpu.matmul %42, %44, %cst_11 {dimension_numbers = #tpu.dot_dimension_numbers<[1], [0], [0], [1], [0, 0, 1, 1], [], []>} : vector<8x16xbf16>, vector<16x8xbf16>, vector<8x8xf32> -> vector<8x8xf32>
    %cst_12 = arith.constant -1.000000e+09 : f32
    %46 = vector.broadcast %cst_12 : f32 to vector<8x8xf32>
    %47 = arith.select %10, %45, %46 : vector<8x8xi1>, vector<8x8xf32>
    %cst_13 = arith.constant dense<0xFF800000> : vector<8xf32>
    %48 = vector.multi_reduction <maximumf>, %47, %cst_13 [1] : vector<8x8xf32> to vector<8xf32>
    %49 = vector.shape_cast %48 : vector<8xf32> to vector<8x1xf32>
    %50 = vector.broadcast %49 : vector<8x1xf32> to vector<8x8xf32>
    %51 = arith.subf %47, %50 : vector<8x8xf32>
    %52 = math.exp %51 : vector<8x8xf32>
    %cst_14 = arith.constant dense<0.000000e+00> : vector<8xf32>
    %53 = vector.multi_reduction <add>, %52, %cst_14 [1] : vector<8x8xf32> to vector<8xf32>
    %54 = vector.shape_cast %53 : vector<8xf32> to vector<8x1xf32>
    %55 = arith.truncf %52 : vector<8x8xf32> to vector<8x8xbf16>
    %56 = arith.truncf %41 : vector<8x16xf32> to vector<8x16xbf16>
    %cst_15 = arith.constant dense<0.000000e+00> : vector<8x16xf32>
    %57 = tpu.matmul %55, %56, %cst_15 {dimension_numbers = #tpu.dot_dimension_numbers<[1], [0], [0], [1], [0, 0, 1, 1], [], []>} : vector<8x8xbf16>, vector<8x16xbf16>, vector<8x16xf32> -> vector<8x16xf32>
    %58 = tpu.reciprocal %54 {approx = true} : vector<8x1xf32> -> vector<8x1xf32>
    %59 = vector.broadcast %58 : vector<8x1xf32> to vector<8x16xf32>
    %60 = arith.mulf %57, %59 : vector<8x16xf32>
    %cst_16 = arith.constant 0.000000e+00 : f32
    %61 = vector.broadcast %cst_16 : f32 to vector<8x32xf32>
    %c0_17 = arith.constant 0 : index
    %c0_18 = arith.constant 0 : index
    %62 = vector.load %arg5[%c0_17, %c0_18] : memref<32x32xbf16, #tpu.memory_space<vmem>>, vector<16x32xbf16>
    %63 = arith.truncf %38 : vector<8x16xf32> to vector<8x16xbf16>
    %cst_19 = arith.constant dense<0.000000e+00> : vector<8x32xf32>
    %64 = tpu.matmul %63, %62, %cst_19 {dimension_numbers = #tpu.dot_dimension_numbers<[1], [0], [0], [1], [0, 0, 1, 1], [], []>} : vector<8x16xbf16>, vector<16x32xbf16>, vector<8x32xf32> -> vector<8x32xf32>
    %65 = arith.addf %61, %64 : vector<8x32xf32>
    %c16 = arith.constant 16 : index
    %c0_20 = arith.constant 0 : index
    %66 = vector.load %arg5[%c16, %c0_20] : memref<32x32xbf16, #tpu.memory_space<vmem>>, vector<16x32xbf16>
    %67 = arith.truncf %60 : vector<8x16xf32> to vector<8x16xbf16>
    %cst_21 = arith.constant dense<0.000000e+00> : vector<8x32xf32>
    %68 = tpu.matmul %67, %66, %cst_21 {dimension_numbers = #tpu.dot_dimension_numbers<[1], [0], [0], [1], [0, 0, 1, 1], [], []>} : vector<8x16xbf16>, vector<16x32xbf16>, vector<8x32xf32> -> vector<8x32xf32>
    %69 = arith.addf %65, %68 : vector<8x32xf32>
    %c0_22 = arith.constant 0 : index
    %c0_23 = arith.constant 0 : index
    %70 = vector.load %arg6[%c0_22, %c0_23] : memref<1x32xf32, #tpu.memory_space<vmem>>, vector<1x32xf32>
    %71 = vector.broadcast %70 : vector<1x32xf32> to vector<8x32xf32>
    %72 = arith.addf %69, %71 : vector<8x32xf32>
    %73 = arith.addf %72, %3 : vector<8x32xf32>
    %c0_24 = arith.constant 0 : index
    %c0_25 = arith.constant 0 : index
    %74 = vector.load %arg7[%c0_24, %c0_25] : memref<1x32xf32, #tpu.memory_space<vmem>>, vector<1x32xf32>
    %c0_26 = arith.constant 0 : index
    %c0_27 = arith.constant 0 : index
    %75 = vector.load %arg8[%c0_26, %c0_27] : memref<1x32xf32, #tpu.memory_space<vmem>>, vector<1x32xf32>
    %cst_28 = arith.constant dense<0.000000e+00> : vector<8xf32>
    %76 = vector.multi_reduction <add>, %73, %cst_28 [1] : vector<8x32xf32> to vector<8xf32>
    %77 = vector.shape_cast %76 : vector<8xf32> to vector<8x1xf32>
    %cst_29 = arith.constant 3.200000e+01 : f32
    %78 = vector.broadcast %cst_29 : f32 to vector<8x1xf32>
    %79 = arith.divf %77, %78 : vector<8x1xf32>
    %80 = vector.broadcast %79 : vector<8x1xf32> to vector<8x32xf32>
    %81 = arith.subf %73, %80 : vector<8x32xf32>
    %82 = arith.mulf %81, %81 : vector<8x32xf32>
    %cst_30 = arith.constant dense<0.000000e+00> : vector<8xf32>
    %83 = vector.multi_reduction <add>, %82, %cst_30 [1] : vector<8x32xf32> to vector<8xf32>
    %84 = vector.shape_cast %83 : vector<8xf32> to vector<8x1xf32>
    %cst_31 = arith.constant 3.200000e+01 : f32
    %85 = vector.broadcast %cst_31 : f32 to vector<8x1xf32>
    %86 = arith.divf %84, %85 : vector<8x1xf32>
    %87 = vector.broadcast %79 : vector<8x1xf32> to vector<8x32xf32>
    %88 = arith.subf %73, %87 : vector<8x32xf32>
    %cst_32 = arith.constant 9.99999974E-6 : f32
    %89 = vector.broadcast %cst_32 : f32 to vector<8x1xf32>
    %90 = arith.addf %86, %89 : vector<8x1xf32>
    %91 = math.rsqrt %90 : vector<8x1xf32>
    %92 = vector.broadcast %91 : vector<8x1xf32> to vector<8x32xf32>
    %93 = arith.mulf %88, %92 : vector<8x32xf32>
    %94 = vector.broadcast %74 : vector<1x32xf32> to vector<8x32xf32>
    %95 = arith.mulf %93, %94 : vector<8x32xf32>
    %96 = vector.broadcast %75 : vector<1x32xf32> to vector<8x32xf32>
    %97 = arith.addf %95, %96 : vector<8x32xf32>
    %98 = tpu.iota {dimensions = array<i32: 0>} : vector<8x1xi32>
    %c-1_i32 = arith.constant -1 : i32
    %99 = vector.broadcast %c-1_i32 : i32 to vector<8x1xi32>
    %100 = arith.addi %98, %99 : vector<8x1xi32>
    %c0_i32 = arith.constant 0 : i32
    %101 = vector.broadcast %c0_i32 : i32 to vector<8x1xi32>
    %102 = arith.cmpi sge, %100, %101 : vector<8x1xi32>
    %c-1_i32_33 = arith.constant -1 : i32
    %103 = vector.broadcast %c-1_i32_33 : i32 to vector<8x1xi32>
    %104 = arith.addi %98, %103 : vector<8x1xi32>
    %c8_i32 = arith.constant 8 : i32
    %105 = vector.broadcast %c8_i32 : i32 to vector<8x1xi32>
    %106 = arith.cmpi slt, %104, %105 : vector<8x1xi32>
    %107 = arith.andi %102, %106 : vector<8x1xi1>
    %c1_i32 = arith.constant 1 : i32
    %108 = vector.broadcast %c1_i32 : i32 to vector<8x1xi32>
    %109 = arith.addi %98, %108 : vector<8x1xi32>
    %c0_i32_34 = arith.constant 0 : i32
    %110 = vector.broadcast %c0_i32_34 : i32 to vector<8x1xi32>
    %111 = arith.cmpi sge, %109, %110 : vector<8x1xi32>
    %c1_i32_35 = arith.constant 1 : i32
    %112 = vector.broadcast %c1_i32_35 : i32 to vector<8x1xi32>
    %113 = arith.addi %98, %112 : vector<8x1xi32>
    %c8_i32_36 = arith.constant 8 : i32
    %114 = vector.broadcast %c8_i32_36 : i32 to vector<8x1xi32>
    %115 = arith.cmpi slt, %113, %114 : vector<8x1xi32>
    %116 = arith.andi %111, %115 : vector<8x1xi1>
    %cst_37 = arith.constant 0.000000e+00 : f32
    %117 = vector.broadcast %cst_37 : f32 to vector<8x64xf32>
    %c1_i32_38 = arith.constant 1 : i32
    %118 = tpu.dynamic_rotate %97 by %c1_i32_38 dim 0 : vector<8x32xf32>, i32 -> vector<8x32xf32>
    %cst_39 = arith.constant 0.000000e+00 : f32
    %119 = vector.shape_cast %107 : vector<8x1xi1> to vector<8x1xi1>
    %120 = vector.broadcast %119 : vector<8x1xi1> to vector<8x32xi1>
    %121 = vector.broadcast %cst_39 : f32 to vector<8x32xf32>
    %122 = arith.select %120, %118, %121 : vector<8x32xi1>, vector<8x32xf32>
    %123 = arith.truncf %122 : vector<8x32xf32> to vector<8x32xbf16>
    %c0_40 = arith.constant 0 : index
    %c0_41 = arith.constant 0 : index
    %c0_42 = arith.constant 0 : index
    %124 = vector.load %arg9[%c0_40, %c0_41, %c0_42] : memref<3x32x64xbf16, #tpu.memory_space<vmem>>, vector<1x32x64xbf16>
    %125 = vector.shape_cast %124 : vector<1x32x64xbf16> to vector<32x64xbf16>
    %cst_43 = arith.constant dense<0.000000e+00> : vector<8x64xf32>
    %126 = tpu.matmul %123, %125, %cst_43 {dimension_numbers = #tpu.dot_dimension_numbers<[1], [0], [0], [1], [0, 0, 1, 1], [], []>} : vector<8x32xbf16>, vector<32x64xbf16>, vector<8x64xf32> -> vector<8x64xf32>
    %127 = arith.addf %117, %126 : vector<8x64xf32>
    %128 = arith.truncf %97 : vector<8x32xf32> to vector<8x32xbf16>
    %c1 = arith.constant 1 : index
    %c0_44 = arith.constant 0 : index
    %c0_45 = arith.constant 0 : index
    %129 = vector.load %arg9[%c1, %c0_44, %c0_45] : memref<3x32x64xbf16, #tpu.memory_space<vmem>>, vector<1x32x64xbf16>
    %130 = vector.shape_cast %129 : vector<1x32x64xbf16> to vector<32x64xbf16>
    %cst_46 = arith.constant dense<0.000000e+00> : vector<8x64xf32>
    %131 = tpu.matmul %128, %130, %cst_46 {dimension_numbers = #tpu.dot_dimension_numbers<[1], [0], [0], [1], [0, 0, 1, 1], [], []>} : vector<8x32xbf16>, vector<32x64xbf16>, vector<8x64xf32> -> vector<8x64xf32>
    %132 = arith.addf %127, %131 : vector<8x64xf32>
    %c7_i32 = arith.constant 7 : i32
    %133 = tpu.dynamic_rotate %97 by %c7_i32 dim 0 : vector<8x32xf32>, i32 -> vector<8x32xf32>
    %cst_47 = arith.constant 0.000000e+00 : f32
    %134 = vector.shape_cast %116 : vector<8x1xi1> to vector<8x1xi1>
    %135 = vector.broadcast %134 : vector<8x1xi1> to vector<8x32xi1>
    %136 = vector.broadcast %cst_47 : f32 to vector<8x32xf32>
    %137 = arith.select %135, %133, %136 : vector<8x32xi1>, vector<8x32xf32>
    %138 = arith.truncf %137 : vector<8x32xf32> to vector<8x32xbf16>
    %c2 = arith.constant 2 : index
    %c0_48 = arith.constant 0 : index
    %c0_49 = arith.constant 0 : index
    %139 = vector.load %arg9[%c2, %c0_48, %c0_49] : memref<3x32x64xbf16, #tpu.memory_space<vmem>>, vector<1x32x64xbf16>
    %140 = vector.shape_cast %139 : vector<1x32x64xbf16> to vector<32x64xbf16>
    %cst_50 = arith.constant dense<0.000000e+00> : vector<8x64xf32>
    %141 = tpu.matmul %138, %140, %cst_50 {dimension_numbers = #tpu.dot_dimension_numbers<[1], [0], [0], [1], [0, 0, 1, 1], [], []>} : vector<8x32xbf16>, vector<32x64xbf16>, vector<8x64xf32> -> vector<8x64xf32>
    %142 = arith.addf %132, %141 : vector<8x64xf32>
    %c0_51 = arith.constant 0 : index
    %c0_52 = arith.constant 0 : index
    %143 = vector.load %arg10[%c0_51, %c0_52] : memref<1x64xf32, #tpu.memory_space<vmem>>, vector<1x64xf32>
    %144 = vector.broadcast %143 : vector<1x64xf32> to vector<8x64xf32>
    %145 = arith.addf %142, %144 : vector<8x64xf32>
    %cst_53 = arith.constant 0.000000e+00 : f32
    %146 = vector.broadcast %cst_53 : f32 to vector<8x64xf32>
    %147 = arith.maximumf %145, %146 : vector<8x64xf32>
    %cst_54 = arith.constant 0.000000e+00 : f32
    %148 = vector.broadcast %cst_54 : f32 to vector<8x32xf32>
    %c1_i32_55 = arith.constant 1 : i32
    %149 = tpu.dynamic_rotate %147 by %c1_i32_55 dim 0 : vector<8x64xf32>, i32 -> vector<8x64xf32>
    %cst_56 = arith.constant 0.000000e+00 : f32
    %150 = vector.shape_cast %107 : vector<8x1xi1> to vector<8x1xi1>
    %151 = vector.broadcast %150 : vector<8x1xi1> to vector<8x64xi1>
    %152 = vector.broadcast %cst_56 : f32 to vector<8x64xf32>
    %153 = arith.select %151, %149, %152 : vector<8x64xi1>, vector<8x64xf32>
    %154 = arith.truncf %153 : vector<8x64xf32> to vector<8x64xbf16>
    %c0_57 = arith.constant 0 : index
    %c0_58 = arith.constant 0 : index
    %c0_59 = arith.constant 0 : index
    %155 = vector.load %arg11[%c0_57, %c0_58, %c0_59] : memref<3x64x32xbf16, #tpu.memory_space<vmem>>, vector<1x64x32xbf16>
    %156 = vector.shape_cast %155 : vector<1x64x32xbf16> to vector<64x32xbf16>
    %cst_60 = arith.constant dense<0.000000e+00> : vector<8x32xf32>
    %157 = tpu.matmul %154, %156, %cst_60 {dimension_numbers = #tpu.dot_dimension_numbers<[1], [0], [0], [1], [0, 0, 1, 1], [], []>} : vector<8x64xbf16>, vector<64x32xbf16>, vector<8x32xf32> -> vector<8x32xf32>
    %158 = arith.addf %148, %157 : vector<8x32xf32>
    %159 = arith.truncf %147 : vector<8x64xf32> to vector<8x64xbf16>
    %c1_61 = arith.constant 1 : index
    %c0_62 = arith.constant 0 : index
    %c0_63 = arith.constant 0 : index
    %160 = vector.load %arg11[%c1_61, %c0_62, %c0_63] : memref<3x64x32xbf16, #tpu.memory_space<vmem>>, vector<1x64x32xbf16>
    %161 = vector.shape_cast %160 : vector<1x64x32xbf16> to vector<64x32xbf16>
    %cst_64 = arith.constant dense<0.000000e+00> : vector<8x32xf32>
    %162 = tpu.matmul %159, %161, %cst_64 {dimension_numbers = #tpu.dot_dimension_numbers<[1], [0], [0], [1], [0, 0, 1, 1], [], []>} : vector<8x64xbf16>, vector<64x32xbf16>, vector<8x32xf32> -> vector<8x32xf32>
    %163 = arith.addf %158, %162 : vector<8x32xf32>
    %c7_i32_65 = arith.constant 7 : i32
    %164 = tpu.dynamic_rotate %147 by %c7_i32_65 dim 0 : vector<8x64xf32>, i32 -> vector<8x64xf32>
    %cst_66 = arith.constant 0.000000e+00 : f32
    %165 = vector.shape_cast %116 : vector<8x1xi1> to vector<8x1xi1>
    %166 = vector.broadcast %165 : vector<8x1xi1> to vector<8x64xi1>
    %167 = vector.broadcast %cst_66 : f32 to vector<8x64xf32>
    %168 = arith.select %166, %164, %167 : vector<8x64xi1>, vector<8x64xf32>
    %169 = arith.truncf %168 : vector<8x64xf32> to vector<8x64xbf16>
    %c2_67 = arith.constant 2 : index
    %c0_68 = arith.constant 0 : index
    %c0_69 = arith.constant 0 : index
    %170 = vector.load %arg11[%c2_67, %c0_68, %c0_69] : memref<3x64x32xbf16, #tpu.memory_space<vmem>>, vector<1x64x32xbf16>
    %171 = vector.shape_cast %170 : vector<1x64x32xbf16> to vector<64x32xbf16>
    %cst_70 = arith.constant dense<0.000000e+00> : vector<8x32xf32>
    %172 = tpu.matmul %169, %171, %cst_70 {dimension_numbers = #tpu.dot_dimension_numbers<[1], [0], [0], [1], [0, 0, 1, 1], [], []>} : vector<8x64xbf16>, vector<64x32xbf16>, vector<8x32xf32> -> vector<8x32xf32>
    %173 = arith.addf %163, %172 : vector<8x32xf32>
    %c0_71 = arith.constant 0 : index
    %c0_72 = arith.constant 0 : index
    %174 = vector.load %arg12[%c0_71, %c0_72] : memref<1x32xf32, #tpu.memory_space<vmem>>, vector<1x32xf32>
    %175 = vector.broadcast %174 : vector<1x32xf32> to vector<8x32xf32>
    %176 = arith.addf %173, %175 : vector<8x32xf32>
    %177 = arith.addf %176, %97 : vector<8x32xf32>
    %c0_73 = arith.constant 0 : index
    %c0_74 = arith.constant 0 : index
    %178 = vector.load %arg13[%c0_73, %c0_74] : memref<1x32xf32, #tpu.memory_space<vmem>>, vector<1x32xf32>
    %c0_75 = arith.constant 0 : index
    %c0_76 = arith.constant 0 : index
    %179 = vector.load %arg14[%c0_75, %c0_76] : memref<1x32xf32, #tpu.memory_space<vmem>>, vector<1x32xf32>
    %cst_77 = arith.constant dense<0.000000e+00> : vector<8xf32>
    %180 = vector.multi_reduction <add>, %177, %cst_77 [1] : vector<8x32xf32> to vector<8xf32>
    %181 = vector.shape_cast %180 : vector<8xf32> to vector<8x1xf32>
    %cst_78 = arith.constant 3.200000e+01 : f32
    %182 = vector.broadcast %cst_78 : f32 to vector<8x1xf32>
    %183 = arith.divf %181, %182 : vector<8x1xf32>
    %184 = vector.broadcast %183 : vector<8x1xf32> to vector<8x32xf32>
    %185 = arith.subf %177, %184 : vector<8x32xf32>
    %186 = arith.mulf %185, %185 : vector<8x32xf32>
    %cst_79 = arith.constant dense<0.000000e+00> : vector<8xf32>
    %187 = vector.multi_reduction <add>, %186, %cst_79 [1] : vector<8x32xf32> to vector<8xf32>
    %188 = vector.shape_cast %187 : vector<8xf32> to vector<8x1xf32>
    %cst_80 = arith.constant 3.200000e+01 : f32
    %189 = vector.broadcast %cst_80 : f32 to vector<8x1xf32>
    %190 = arith.divf %188, %189 : vector<8x1xf32>
    %191 = vector.broadcast %183 : vector<8x1xf32> to vector<8x32xf32>
    %192 = arith.subf %177, %191 : vector<8x32xf32>
    %cst_81 = arith.constant 9.99999974E-6 : f32
    %193 = vector.broadcast %cst_81 : f32 to vector<8x1xf32>
    %194 = arith.addf %190, %193 : vector<8x1xf32>
    %195 = math.rsqrt %194 : vector<8x1xf32>
    %196 = vector.broadcast %195 : vector<8x1xf32> to vector<8x32xf32>
    %197 = arith.mulf %192, %196 : vector<8x32xf32>
    %198 = vector.broadcast %178 : vector<1x32xf32> to vector<8x32xf32>
    %199 = arith.mulf %197, %198 : vector<8x32xf32>
    %200 = vector.broadcast %179 : vector<1x32xf32> to vector<8x32xf32>
    %201 = arith.addf %199, %200 : vector<8x32xf32>
    %c0_82 = arith.constant 0 : index
    %c0_83 = arith.constant 0 : index
    %c0_84 = arith.constant 0 : index
    %202 = vector.load %arg15[%c0_82, %c0_83, %c0_84] : memref<1x8x32xf32, #tpu.memory_space<vmem>>, vector<1x8x32xf32>
    %203 = vector.shape_cast %202 : vector<1x8x32xf32> to vector<8x32xf32>
    %204 = vector.shape_cast %201 : vector<8x32xf32> to vector<1x8x32xf32>
    tpu.vector_store %arg15[%c0_82, %c0_83, %c0_84], %204 {strides = array<i32>} : memref<1x8x32xf32, #tpu.memory_space<vmem>>, vector<1x8x32xf32>,
    return
  }
  func.func @transform_0(%arg0: i32, %arg1: memref<2xi32, #tpu.memory_space<smem>>) -> (i32, i32, i32) {
    %c0_i32 = arith.constant 0 : i32
    %c0_i32_0 = arith.constant 0 : i32
    %c0_i32_1 = arith.constant 0 : i32
    return %arg0, %c0_i32, %c0_i32_0 : i32, i32, i32
  }
  func.func @transform_1(%arg0: i32, %arg1: memref<2xi32, #tpu.memory_space<smem>>) -> (i32, i32) {
    %c0_i32 = arith.constant 0 : i32
    %c0_i32_0 = arith.constant 0 : i32
    %c0_i32_1 = arith.constant 0 : i32
    return %c0_i32, %c0_i32_0 : i32, i32
  }
  func.func @transform_2(%arg0: i32, %arg1: memref<2xi32, #tpu.memory_space<smem>>) -> (i32, i32) {
    %c0_i32 = arith.constant 0 : i32
    %c0_i32_0 = arith.constant 0 : i32
    %c0_i32_1 = arith.constant 0 : i32
    return %c0_i32, %c0_i32_0 : i32, i32
  }
  func.func @transform_3(%arg0: i32, %arg1: memref<2xi32, #tpu.memory_space<smem>>) -> (i32, i32) {
    %c0_i32 = arith.constant 0 : i32
    %c0_i32_0 = arith.constant 0 : i32
    %c0_i32_1 = arith.constant 0 : i32
    return %c0_i32, %c0_i32_0 : i32, i32
  }
  func.func @transform_4(%arg0: i32, %arg1: memref<2xi32, #tpu.memory_space<smem>>) -> (i32, i32) {
    %c0_i32 = arith.constant 0 : i32
    %c0_i32_0 = arith.constant 0 : i32
    %c0_i32_1 = arith.constant 0 : i32
    return %c0_i32, %c0_i32_0 : i32, i32
  }
  func.func @transform_5(%arg0: i32, %arg1: memref<2xi32, #tpu.memory_space<smem>>) -> (i32, i32) {
    %c0_i32 = arith.constant 0 : i32
    %c0_i32_0 = arith.constant 0 : i32
    %c0_i32_1 = arith.constant 0 : i32
    return %c0_i32, %c0_i32_0 : i32, i32
  }
  func.func @transform_6(%arg0: i32, %arg1: memref<2xi32, #tpu.memory_space<smem>>) -> (i32, i32) {
    %c0_i32 = arith.constant 0 : i32
    %c0_i32_0 = arith.constant 0 : i32
    %c0_i32_1 = arith.constant 0 : i32
    return %c0_i32, %c0_i32_0 : i32, i32
  }
  func.func @transform_7(%arg0: i32, %arg1: memref<2xi32, #tpu.memory_space<smem>>) -> (i32, i32, i32) {
    %c0_i32 = arith.constant 0 : i32
    %c0_i32_0 = arith.constant 0 : i32
    %c0_i32_1 = arith.constant 0 : i32
    %c0_i32_2 = arith.constant 0 : i32
    return %c0_i32, %c0_i32_0, %c0_i32_1 : i32, i32, i32
  }
  func.func @transform_8(%arg0: i32, %arg1: memref<2xi32, #tpu.memory_space<smem>>) -> (i32, i32) {
    %c0_i32 = arith.constant 0 : i32
    %c0_i32_0 = arith.constant 0 : i32
    %c0_i32_1 = arith.constant 0 : i32
    return %c0_i32, %c0_i32_0 : i32, i32
  }
  func.func @transform_9(%arg0: i32, %arg1: memref<2xi32, #tpu.memory_space<smem>>) -> (i32, i32, i32) {
    %c0_i32 = arith.constant 0 : i32
    %c0_i32_0 = arith.constant 0 : i32
    %c0_i32_1 = arith.constant 0 : i32
    %c0_i32_2 = arith.constant 0 : i32
    return %c0_i32, %c0_i32_0, %c0_i32_1 : i32, i32, i32
  }
  func.func @transform_10(%arg0: i32, %arg1: memref<2xi32, #tpu.memory_space<smem>>) -> (i32, i32) {
    %c0_i32 = arith.constant 0 : i32
    %c0_i32_0 = arith.constant 0 : i32
    %c0_i32_1 = arith.constant 0 : i32
    return %c0_i32, %c0_i32_0 : i32, i32
  }
  func.func @transform_11(%arg0: i32, %arg1: memref<2xi32, #tpu.memory_space<smem>>) -> (i32, i32) {
    %c0_i32 = arith.constant 0 : i32
    %c0_i32_0 = arith.constant 0 : i32
    %c0_i32_1 = arith.constant 0 : i32
    return %c0_i32, %c0_i32_0 : i32, i32
  }
  func.func @transform_12(%arg0: i32, %arg1: memref<2xi32, #tpu.memory_space<smem>>) -> (i32, i32) {
    %c0_i32 = arith.constant 0 : i32
    %c0_i32_0 = arith.constant 0 : i32
    %c0_i32_1 = arith.constant 0 : i32
    return %c0_i32, %c0_i32_0 : i32, i32
  }
  func.func @transform_13(%arg0: i32, %arg1: memref<2xi32, #tpu.memory_space<smem>>) -> (i32, i32, i32) {
    %c0_i32 = arith.constant 0 : i32
    %c0_i32_0 = arith.constant 0 : i32
    %c0_i32_1 = arith.constant 0 : i32
    return %arg0, %c0_i32, %c0_i32_0 : i32, i32, i32
  }
}

</mosaic_0001>

<llo_original>
// kernel: tpu_custom_call.1
$region0: #{tpu_custom_call.1}
  #allocation0 [shape = 'u32[]', space=smem, size = 0x4, offset = 0x4, fixed_abs, tag = 'smem constant byte address 0x4 - core index']
  #allocation1 [shape = 'u32[144,128]{1,0:T(1,128)}', space=vmem, size = 0x12000, scoped, tag = 'internal scratch']
  #allocation2 [shape = 's32[1]{0}', space=sflag, size = 0x4, scoped, tag = 'scoped memory for tpu_custom_call.1']
  #allocation3 [shape = 'u8[512]{0}', space=smem, size = 0x200, scoped, tag = 'prefetched SMEM operand 0']
  %s0 = inlined_call_operand.vmem [shape: s32[2], index: 0, kind: input, shape index: {}]
  %s1 = inlined_call_operand.vmem [shape: f32[2,8,32], index: 1, kind: input, shape index: {}]
  %s2 = inlined_call_operand.vmem [shape: bf16[32,96], index: 2, kind: input, shape index: {}]
  %s3 = inlined_call_operand.vmem [shape: f32[1,96], index: 3, kind: input, shape index: {}]
  %s4 = inlined_call_operand.vmem [shape: bf16[32,32], index: 4, kind: input, shape index: {}]
  %s5 = inlined_call_operand.vmem [shape: f32[1,32], index: 5, kind: input, shape index: {}]
  %s6 = inlined_call_operand.vmem [shape: f32[1,32], index: 6, kind: input, shape index: {}]
  %s7 = inlined_call_operand.vmem [shape: f32[1,32], index: 7, kind: input, shape index: {}]
  %s8 = inlined_call_operand.vmem [shape: bf16[3,32,64], index: 8, kind: input, shape index: {}]
  %s9 = inlined_call_operand.vmem [shape: f32[1,64], index: 9, kind: input, shape index: {}]
  %s10 = inlined_call_operand.vmem [shape: bf16[3,64,32], index: 10, kind: input, shape index: {}]
  %s11 = inlined_call_operand.vmem [shape: f32[1,32], index: 11, kind: input, shape index: {}]
  %s12 = inlined_call_operand.vmem [shape: f32[1,32], index: 12, kind: input, shape index: {}]
  %s13 = inlined_call_operand.vmem [shape: f32[1,32], index: 13, kind: input, shape index: {}]
  %s14 = inlined_call_operand.hbm [shape: f32[2,8,32], index: 14, kind: output, shape index: {}]
  %s15 = sld [smem:[#allocation0]]
  $region85: #{tpu_custom_call.1} parent=0
    _
  %s17 = ssub.s32 1, %s15
  %s18 = scalar_select 0, %s17, %s15
  %s19 = sshll.u32 %s0, 4
  %s20 = int_to_ptr.vmem [resolvable:$true] %s19
  %22 = dma.vmem_to_smem %s20, 16, [#allocation3], [#allocation2]
  %23 = dma.done [#allocation2], 16
  %24 = sfence
  $region1: #{tpu_custom_call.1} parent=0
    #allocation4 [shape = 'u8[8192]{0}', space=vmem, size = 0x2000, scoped, tag = 'output window, operand 0']
    #allocation5 [shape = 's32[2]{0}', space=sflag, size = 0x8, scoped, tag = 'scoped memory for tpu_custom_call.1']
    %25 = vsyncpa [#allocation5], 0
    %s26 = scalar_lea.sflag [#allocation5], 1
    %27 = vsyncpa %s26, 0
    loop: start=0, step=1, limit=4
    $region2: #{tpu_custom_call.1} parent=1 // loop_pre_header
      _
    $region3: #{tpu_custom_call.1} parent=1 // loop_header
      %s29 = sphi 0, %s33
      %p30 = scmp.ge.s32.totalorder %s29, 4
      %s39 = sphi 0, %s41
      %s42 = sphi 0, %s39
      %s43 = sphi 0, %s42
      %s59 = sphi 0, %s43
      %s63 = sphi 0, %s63
      %s65 = sphi 0, %s63
      %s66 = sphi 0, %s65
      %s80 = sphi 0, %s66
      %s84 = sphi 0, %s84
      %s86 = sphi 0, %s84
      %s87 = sphi 0, %s86
      %s101 = sphi 0, %s87
      %s105 = sphi 0, %s105
      %s107 = sphi 0, %s105
      %s108 = sphi 0, %s107
      %s122 = sphi 0, %s108
      %s126 = sphi 0, %s126
      %s128 = sphi 0, %s126
      %s129 = sphi 0, %s128
      %s143 = sphi 0, %s129
      %s147 = sphi 0, %s147
      %s149 = sphi 0, %s147
      %s150 = sphi 0, %s149
      %s164 = sphi 0, %s150
      %s168 = sphi 0, %s168
      %s170 = sphi 0, %s168
      %s171 = sphi 0, %s170
      %s185 = sphi 0, %s171
      %s189 = sphi 0, %s189
      %s191 = sphi 0, %s189
      %s192 = sphi 0, %s191
      %s206 = sphi 0, %s192
      %s210 = sphi 0, %s210
      %s212 = sphi 0, %s210
      %s213 = sphi 0, %s212
      %s227 = sphi 0, %s213
      %s231 = sphi 0, %s231
      %s233 = sphi 0, %s231
      %s234 = sphi 0, %s233
      %s248 = sphi 0, %s234
      %s252 = sphi 0, %s252
      %s254 = sphi 0, %s252
      %s255 = sphi 0, %s254
      %s269 = sphi 0, %s255
      %s273 = sphi 0, %s273
      %s275 = sphi 0, %s273
      %s276 = sphi 0, %s275
      %s290 = sphi 0, %s276
      %s294 = sphi 0, %s294
      %s296 = sphi 0, %s294
      %s297 = sphi 0, %s296
      %s311 = sphi 0, %s297
      %s317 = sphi 0, %s319
      %s320 = sphi 0, %s317
      %s321 = sphi 0, %s320
      %s337 = sphi 0, %s321
    $region4: #{tpu_custom_call.1} parent=1 // loop_header_branch
      %32 = sbr.rel (%p30) target = $region8
    $region5: #{tpu_custom_call.1} parent=1 // loop_body
      %s34 = ssub.s32 %s29, 1
      %s35 = ssub.s32 %s29, 2
      %s36 = sadd.s32 %s29, 1
      %s37 = ssub.s32 %s29, %s36
      %p38 = scmp.eq.s32.totalorder %s37, 0
      %s40 = sadd.s32 %s39, 1
      %s41 = scalar_select %p38, %s39, %s40
      %p44 = pneg %p38
      %p45 = scmp.eq.s32.totalorder %s29, 1
      %p46 = por %p44, %p45
      %p47 = scmp.ne.s32.totalorder %s39, %s42
      %p48 = scmp.eq.s32.totalorder %s29, 0
      %p49 = por %p47, %p48
      %p50 = scmp.ne.s32.totalorder %s39, %s42
      %p51 = scmp.eq.s32.totalorder %s34, 1
      %p52 = por %p50, %p51
      %p53 = scmp.ne.s32.totalorder %s42, %s43
      %p54 = scmp.eq.s32.totalorder %s34, 0
      %p55 = por %p53, %p54
      %p56 = scmp.ne.s32.totalorder %s42, %s43
      %p57 = scmp.eq.s32.totalorder %s35, 1
      %p58 = por %p56, %p57
      %p60 = scmp.ne.s32.totalorder %s43, %s59
      %p61 = scmp.eq.s32.totalorder %s35, 0
      %p62 = por %p60, %p61
      %s64 = sadd.s32 %s63, 1
      %p67 = scmp.eq.s32.totalorder %s29, 1
      %p68 = scmp.ne.s32.totalorder %s63, %s65
      %p69 = scmp.eq.s32.totalorder %s29, 0
      %p70 = por %p68, %p69
      %p71 = scmp.ne.s32.totalorder %s63, %s65
      %p72 = scmp.eq.s32.totalorder %s34, 1
      %p73 = por %p71, %p72
      %p74 = scmp.ne.s32.totalorder %s65, %s66
      %p75 = scmp.eq.s32.totalorder %s34, 0
      %p76 = por %p74, %p75
      %p77 = scmp.ne.s32.totalorder %s65, %s66
      %p78 = scmp.eq.s32.totalorder %s35, 1
      %p79 = por %p77, %p78
      %p81 = scmp.ne.s32.totalorder %s66, %s80
      %p82 = scmp.eq.s32.totalorder %s35, 0
      %p83 = por %p81, %p82
      %s85 = sadd.s32 %s84, 1
      %p88 = scmp.eq.s32.totalorder %s29, 1
      %p89 = scmp.ne.s32.totalorder %s84, %s86
      %p90 = scmp.eq.s32.totalorder %s29, 0
      %p91 = por %p89, %p90
      %p92 = scmp.ne.s32.totalorder %s84, %s86
      %p93 = scmp.eq.s32.totalorder %s34, 1
      %p94 = por %p92, %p93
      %p95 = scmp.ne.s32.totalorder %s86, %s87
      %p96 = scmp.eq.s32.totalorder %s34, 0
      %p97 = por %p95, %p96
      %p98 = scmp.ne.s32.totalorder %s86, %s87
      %p99 = scmp.eq.s32.totalorder %s35, 1
      %p100 = por %p98, %p99
      %p102 = scmp.ne.s32.totalorder %s87, %s101
      %p103 = scmp.eq.s32.totalorder %s35, 0
      %p104 = por %p102, %p103
      %s106 = sadd.s32 %s105, 1
      %p109 = scmp.eq.s32.totalorder %s29, 1
      %p110 = scmp.ne.s32.totalorder %s105, %s107
      %p111 = scmp.eq.s32.totalorder %s29, 0
      %p112 = por %p110, %p111
      %p113 = scmp.ne.s32.totalorder %s105, %s107
      %p114 = scmp.eq.s32.totalorder %s34, 1
      %p115 = por %p113, %p114
      %p116 = scmp.ne.s32.totalorder %s107, %s108
      %p117 = scmp.eq.s32.totalorder %s34, 0
      %p118 = por %p116, %p117
      %p119 = scmp.ne.s32.totalorder %s107, %s108
      %p120 = scmp.eq.s32.totalorder %s35, 1
      %p121 = por %p119, %p120
      %p123 = scmp.ne.s32.totalorder %s108, %s122
      %p124 = scmp.eq.s32.totalorder %s35, 0
      %p125 = por %p123, %p124
      %s127 = sadd.s32 %s126, 1
      %p130 = scmp.eq.s32.totalorder %s29, 1
      %p131 = scmp.ne.s32.totalorder %s126, %s128
      %p132 = scmp.eq.s32.totalorder %s29, 0
      %p133 = por %p131, %p132
      %p134 = scmp.ne.s32.totalorder %s126, %s128
      %p135 = scmp.eq.s32.totalorder %s34, 1
      %p136 = por %p134, %p135
      %p137 = scmp.ne.s32.totalorder %s128, %s129
      %p138 = scmp.eq.s32.totalorder %s34, 0
      %p139 = por %p137, %p138
      %p140 = scmp.ne.s32.totalorder %s128, %s129
      %p141 = scmp.eq.s32.totalorder %s35, 1
      %p142 = por %p140, %p141
      %p144 = scmp.ne.s32.totalorder %s129, %s143
      %p145 = scmp.eq.s32.totalorder %s35, 0
      %p146 = por %p144, %p145
      %s148 = sadd.s32 %s147, 1
      %p151 = scmp.eq.s32.totalorder %s29, 1
      %p152 = scmp.ne.s32.totalorder %s147, %s149
      %p153 = scmp.eq.s32.totalorder %s29, 0
      %p154 = por %p152, %p153
      %p155 = scmp.ne.s32.totalorder %s147, %s149
      %p156 = scmp.eq.s32.totalorder %s34, 1
      %p157 = por %p155, %p156
      %p158 = scmp.ne.s32.totalorder %s149, %s150
      %p159 = scmp.eq.s32.totalorder %s34, 0
      %p160 = por %p158, %p159
      %p161 = scmp.ne.s32.totalorder %s149, %s150
      %p162 = scmp.eq.s32.totalorder %s35, 1
      %p163 = por %p161, %p162
      %p165 = scmp.ne.s32.totalorder %s150, %s164
      %p166 = scmp.eq.s32.totalorder %s35, 0
      %p167 = por %p165, %p166
      %s169 = sadd.s32 %s168, 1
      %p172 = scmp.eq.s32.totalorder %s29, 1
      %p173 = scmp.ne.s32.totalorder %s168, %s170
      %p174 = scmp.eq.s32.totalorder %s29, 0
      %p175 = por %p173, %p174
      %p176 = scmp.ne.s32.totalorder %s168, %s170
      %p177 = scmp.eq.s32.totalorder %s34, 1
      %p178 = por %p176, %p177
      %p179 = scmp.ne.s32.totalorder %s170, %s171
      %p180 = scmp.eq.s32.totalorder %s34, 0
      %p181 = por %p179, %p180
      %p182 = scmp.ne.s32.totalorder %s170, %s171
      %p183 = scmp.eq.s32.totalorder %s35, 1
      %p184 = por %p182, %p183
      %p186 = scmp.ne.s32.totalorder %s171, %s185
      %p187 = scmp.eq.s32.totalorder %s35, 0
      %p188 = por %p186, %p187
      %s190 = sadd.s32 %s189, 1
      %p193 = scmp.eq.s32.totalorder %s29, 1
      %p194 = scmp.ne.s32.totalorder %s189, %s191
      %p195 = scmp.eq.s32.totalorder %s29, 0
      %p196 = por %p194, %p195
      %p197 = scmp.ne.s32.totalorder %s189, %s191
      %p198 = scmp.eq.s32.totalorder %s34, 1
      %p199 = por %p197, %p198
      %p200 = scmp.ne.s32.totalorder %s191, %s192
      %p201 = scmp.eq.s32.totalorder %s34, 0
      %p202 = por %p200, %p201
      %p203 = scmp.ne.s32.totalorder %s191, %s192
      %p204 = scmp.eq.s32.totalorder %s35, 1
      %p205 = por %p203, %p204
      %p207 = scmp.ne.s32.totalorder %s192, %s206
      %p208 = scmp.eq.s32.totalorder %s35, 0
      %p209 = por %p207, %p208
      %s211 = sadd.s32 %s210, 1
      %p214 = scmp.eq.s32.totalorder %s29, 1
      %p215 = scmp.ne.s32.totalorder %s210, %s212
      %p216 = scmp.eq.s32.totalorder %s29, 0
      %p217 = por %p215, %p216
      %p218 = scmp.ne.s32.totalorder %s210, %s212
      %p219 = scmp.eq.s32.totalorder %s34, 1
      %p220 = por %p218, %p219
      %p221 = scmp.ne.s32.totalorder %s212, %s213
      %p222 = scmp.eq.s32.totalorder %s34, 0
      %p223 = por %p221, %p222
      %p224 = scmp.ne.s32.totalorder %s212, %s213
      %p225 = scmp.eq.s32.totalorder %s35, 1
      %p226 = por %p224, %p225
      %p228 = scmp.ne.s32.totalorder %s213, %s227
      %p229 = scmp.eq.s32.totalorder %s35, 0
      %p230 = por %p228, %p229
      %s232 = sadd.s32 %s231, 1
      %p235 = scmp.eq.s32.totalorder %s29, 1
      %p236 = scmp.ne.s32.totalorder %s231, %s233
      %p237 = scmp.eq.s32.totalorder %s29, 0
      %p238 = por %p236, %p237
      %p239 = scmp.ne.s32.totalorder %s231, %s233
      %p240 = scmp.eq.s32.totalorder %s34, 1
      %p241 = por %p239, %p240
      %p242 = scmp.ne.s32.totalorder %s233, %s234
      %p243 = scmp.eq.s32.totalorder %s34, 0
      %p244 = por %p242, %p243
      %p245 = scmp.ne.s32.totalorder %s233, %s234
      %p246 = scmp.eq.s32.totalorder %s35, 1
      %p247 = por %p245, %p246
      %p249 = scmp.ne.s32.totalorder %s234, %s248
      %p250 = scmp.eq.s32.totalorder %s35, 0
      %p251 = por %p249, %p250
      %s253 = sadd.s32 %s252, 1
      %p256 = scmp.eq.s32.totalorder %s29, 1
      %p257 = scmp.ne.s32.totalorder %s252, %s254
      %p258 = scmp.eq.s32.totalorder %s29, 0
      %p259 = por %p257, %p258
      %p260 = scmp.ne.s32.totalorder %s252, %s254
      %p261 = scmp.eq.s32.totalorder %s34, 1
      %p262 = por %p260, %p261
      %p263 = scmp.ne.s32.totalorder %s254, %s255
      %p264 = scmp.eq.s32.totalorder %s34, 0
      %p265 = por %p263, %p264
      %p266 = scmp.ne.s32.totalorder %s254, %s255
      %p267 = scmp.eq.s32.totalorder %s35, 1
      %p268 = por %p266, %p267
      %p270 = scmp.ne.s32.totalorder %s255, %s269
      %p271 = scmp.eq.s32.totalorder %s35, 0
      %p272 = por %p270, %p271
      %s274 = sadd.s32 %s273, 1
      %p277 = scmp.eq.s32.totalorder %s29, 1
      %p278 = scmp.ne.s32.totalorder %s273, %s275
      %p279 = scmp.eq.s32.totalorder %s29, 0
      %p280 = por %p278, %p279
      %p281 = scmp.ne.s32.totalorder %s273, %s275
      %p282 = scmp.eq.s32.totalorder %s34, 1
      %p283 = por %p281, %p282
      %p284 = scmp.ne.s32.totalorder %s275, %s276
      %p285 = scmp.eq.s32.totalorder %s34, 0
      %p286 = por %p284, %p285
      %p287 = scmp.ne.s32.totalorder %s275, %s276
      %p288 = scmp.eq.s32.totalorder %s35, 1
      %p289 = por %p287, %p288
      %p291 = scmp.ne.s32.totalorder %s276, %s290
      %p292 = scmp.eq.s32.totalorder %s35, 0
      %p293 = por %p291, %p292
      %s295 = sadd.s32 %s294, 1
      %p298 = scmp.eq.s32.totalorder %s29, 1
      %p299 = scmp.ne.s32.totalorder %s294, %s296
      %p300 = scmp.eq.s32.totalorder %s29, 0
      %p301 = por %p299, %p300
      %p302 = scmp.ne.s32.totalorder %s294, %s296
      %p303 = scmp.eq.s32.totalorder %s34, 1
      %p304 = por %p302, %p303
      %p305 = scmp.ne.s32.totalorder %s296, %s297
      %p306 = scmp.eq.s32.totalorder %s34, 0
      %p307 = por %p305, %p306
      %p308 = scmp.ne.s32.totalorder %s296, %s297
      %p309 = scmp.eq.s32.totalorder %s35, 1
      %p310 = por %p308, %p309
      %p312 = scmp.ne.s32.totalorder %s297, %s311
      %p313 = scmp.eq.s32.totalorder %s35, 0
      %p314 = por %p312, %p313
      %s315 = ssub.s32 %s29, %s36
      %p316 = scmp.eq.s32.totalorder %s315, 0
      %s318 = sadd.s32 %s317, 1
      %s319 = scalar_select %p316, %s317, %s318
      %p322 = pneg %p316
      %p323 = scmp.eq.s32.totalorder %s29, 1
      %p324 = por %p322, %p323
      %p325 = scmp.ne.s32.totalorder %s317, %s320
      %p326 = scmp.eq.s32.totalorder %s29, 0
      %p327 = por %p325, %p326
      %p328 = scmp.ne.s32.totalorder %s317, %s320
      %p329 = scmp.eq.s32.totalorder %s34, 1
      %p330 = por %p328, %p329
      %p331 = scmp.ne.s32.totalorder %s320, %s321
      %p332 = scmp.eq.s32.totalorder %s34, 0
      %p333 = por %p331, %p332
      %p334 = scmp.ne.s32.totalorder %s320, %s321
      %p335 = scmp.eq.s32.totalorder %s35, 1
      %p336 = por %p334, %p335
      %p338 = scmp.ne.s32.totalorder %s321, %s337
      %p339 = scmp.eq.s32.totalorder %s35, 0
      %p340 = por %p338, %p339
      %p341 = scmp.le.s32.totalorder 1, %s29
      %p342 = scmp.lt.s32.totalorder %s29, 3
      %p343 = pnand %p341, %p342
      %p344 = pneg %p343
      // Predicated region
      $region9: #{tpu_custom_call.1} parent=5 // pred_check
        _
      $region10: #{tpu_custom_call.1} parent=5 // pred_check_branch
        %346 = sbr.rel (%p343) target = $region12
      $region11: #{tpu_custom_call.1} parent=5 // pred_region
        %s347 = ssub.s32 %s29, 1
        // Predicated region
        $region13: #{tpu_custom_call.1} parent=11 // pred_check
          %p348 = pneg %p76
        $region14: #{tpu_custom_call.1} parent=11 // pred_check_branch
          %350 = sbr.rel (%p348) target = $region16
        $region15: #{tpu_custom_call.1} parent=11 // pred_region
          _
        $region16: #{tpu_custom_call.1} parent=11 // pred_fallthru
          _
        // Predicated region
        $region17: #{tpu_custom_call.1} parent=11 // pred_check
          %p351 = pneg %p97
        $region18: #{tpu_custom_call.1} parent=11 // pred_check_branch
          %353 = sbr.rel (%p351) target = $region20
        $region19: #{tpu_custom_call.1} parent=11 // pred_region
          _
        $region20: #{tpu_custom_call.1} parent=11 // pred_fallthru
          _
        // Predicated region
        $region21: #{tpu_custom_call.1} parent=11 // pred_check
          %p354 = pneg %p118
        $region22: #{tpu_custom_call.1} parent=11 // pred_check_branch
          %356 = sbr.rel (%p354) target = $region24
        $region23: #{tpu_custom_call.1} parent=11 // pred_region
          _
        $region24: #{tpu_custom_call.1} parent=11 // pred_fallthru
          _
        // Predicated region
        $region25: #{tpu_custom_call.1} parent=11 // pred_check
          %p357 = pneg %p139
        $region26: #{tpu_custom_call.1} parent=11 // pred_check_branch
          %359 = sbr.rel (%p357) target = $region28
        $region27: #{tpu_custom_call.1} parent=11 // pred_region
          _
        $region28: #{tpu_custom_call.1} parent=11 // pred_fallthru
          _
        // Predicated region
        $region29: #{tpu_custom_call.1} parent=11 // pred_check
          %p360 = pneg %p160
        $region30: #{tpu_custom_call.1} parent=11 // pred_check_branch
          %362 = sbr.rel (%p360) target = $region32
        $region31: #{tpu_custom_call.1} parent=11 // pred_region
          _
        $region32: #{tpu_custom_call.1} parent=11 // pred_fallthru
          _
        // Predicated region
        $region33: #{tpu_custom_call.1} parent=11 // pred_check
          %p363 = pneg %p181
        $region34: #{tpu_custom_call.1} parent=11 // pred_check_branch
          %365 = sbr.rel (%p363) target = $region36
        $region35: #{tpu_custom_call.1} parent=11 // pred_region
          _
        $region36: #{tpu_custom_call.1} parent=11 // pred_fallthru
          _
        // Predicated region
        $region37: #{tpu_custom_call.1} parent=11 // pred_check
          %p366 = pneg %p202
        $region38: #{tpu_custom_call.1} parent=11 // pred_check_branch
          %368 = sbr.rel (%p366) target = $region40
        $region39: #{tpu_custom_call.1} parent=11 // pred_region
          _
        $region40: #{tpu_custom_call.1} parent=11 // pred_fallthru
          _
        // Predicated region
        $region41: #{tpu_custom_call.1} parent=11 // pred_check
          %p369 = pneg %p223
        $region42: #{tpu_custom_call.1} parent=11 // pred_check_branch
          %371 = sbr.rel (%p369) target = $region44
        $region43: #{tpu_custom_call.1} parent=11 // pred_region
          _
        $region44: #{tpu_custom_call.1} parent=11 // pred_fallthru
          _
        // Predicated region
        $region45: #{tpu_custom_call.1} parent=11 // pred_check
          %p372 = pneg %p244
        $region46: #{tpu_custom_call.1} parent=11 // pred_check_branch
          %374 = sbr.rel (%p372) target = $region48
        $region47: #{tpu_custom_call.1} parent=11 // pred_region
          _
        $region48: #{tpu_custom_call.1} parent=11 // pred_fallthru
          _
        // Predicated region
        $region49: #{tpu_custom_call.1} parent=11 // pred_check
          %p375 = pneg %p265
        $region50: #{tpu_custom_call.1} parent=11 // pred_check_branch
          %377 = sbr.rel (%p375) target = $region52
        $region51: #{tpu_custom_call.1} parent=11 // pred_region
          _
        $region52: #{tpu_custom_call.1} parent=11 // pred_fallthru
          _
        // Predicated region
        $region53: #{tpu_custom_call.1} parent=11 // pred_check
          %p378 = pneg %p286
        $region54: #{tpu_custom_call.1} parent=11 // pred_check_branch
          %380 = sbr.rel (%p378) target = $region56
        $region55: #{tpu_custom_call.1} parent=11 // pred_region
          _
        $region56: #{tpu_custom_call.1} parent=11 // pred_fallthru
          _
        // Predicated region
        $region57: #{tpu_custom_call.1} parent=11 // pred_check
          %p381 = pneg %p307
        $region58: #{tpu_custom_call.1} parent=11 // pred_check_branch
          %383 = sbr.rel (%p381) target = $region60
        $region59: #{tpu_custom_call.1} parent=11 // pred_region
          _
        $region60: #{tpu_custom_call.1} parent=11 // pred_fallthru
          _
      $region12: #{tpu_custom_call.1} parent=5 // pred_fallthru
        _
      %p384 = scmp.lt.s32.totalorder %s29, 2
      // Predicated region
      $region61: #{tpu_custom_call.1} parent=5 // pred_check
        %p385 = pneg %p384
      $region62: #{tpu_custom_call.1} parent=5 // pred_check_branch
        %387 = sbr.rel (%p385) target = $region64
      $region63: #{tpu_custom_call.1} parent=5 // pred_region
        // Predicated region
        $region65: #{tpu_custom_call.1} parent=63 // pred_check
          %p388 = pneg %p49
        $region66: #{tpu_custom_call.1} parent=63 // pred_check_branch
          %390 = sbr.rel (%p388) target = $region68
        $region67: #{tpu_custom_call.1} parent=63 // pred_region
          %p391 = scmp.lt.s32.totalorder %s29, 1
          %s392 = scalar_select %p391, %s29, 1
          %s393 = smul.addr %s392, 8
          %s394 = scalar_lea.vmem %s1, %s393
        $region68: #{tpu_custom_call.1} parent=63 // pred_fallthru
          _
      $region64: #{tpu_custom_call.1} parent=5 // pred_fallthru
        _
      %p395 = scmp.le.s32.totalorder 1, %s29
      %p396 = scmp.lt.s32.totalorder %s29, 3
      %p397 = pnand %p395, %p396
      %p398 = pneg %p397
      // Predicated region
      $region69: #{tpu_custom_call.1} parent=5 // pred_check
        _
      $region70: #{tpu_custom_call.1} parent=5 // pred_check_branch
        %400 = sbr.rel (%p397) target = $region72
      $region71: #{tpu_custom_call.1} parent=5 // pred_region
        %s401 = ssub.s32 %s29, 1
        %p402 = scmp.lt.s32.totalorder %s34, 1
        %s403 = scalar_select %p402, %s34, 1
        %s404 = smul.addr %s403, 8
        %s405 = scalar_lea.vmem %s1, %s404
        %p406 = pneg %p55
        %p407 = pneg %p52
        %p408 = pneg %p76
        %p409 = pneg %p73
        %p410 = pneg %p97
        %p411 = pneg %p94
        %p412 = pneg %p118
        %p413 = pneg %p115
        %p414 = pneg %p139
        %p415 = pneg %p136
        %p416 = pneg %p160
        %p417 = pneg %p157
        %p418 = pneg %p181
        %p419 = pneg %p178
        %p420 = pneg %p202
        %p421 = pneg %p199
        %p422 = pneg %p223
        %p423 = pneg %p220
        %p424 = pneg %p244
        %p425 = pneg %p241
        %p426 = pneg %p265
        %p427 = pneg %p262
        %p428 = pneg %p286
        %p429 = pneg %p283
        %p430 = pneg %p307
        %p431 = pneg %p304
        %p432 = pneg %p333
        %p433 = pneg %p330
        %s434 = sand.u32 %s320, 1
        %s435 = scalar_lea.sflag [#allocation5], %s434
        %s436 = sand.u32 %s320, 1
        %s437 = smul.addr %s436, 8
        %s438 = scalar_lea.vmem [#allocation4], %s437
        %p439 = scmp.lt.s32.totalorder %s34, 1
        %s440 = scalar_select %p439, %s34, 1
        %s441 = smul.addr %s440, 8
        %s442 = scalar_lea.vmem %s1, %s441
        %s444 = sld [smem:[#allocation3 + %s34]]
        %v445 = vld [vmem:[%s442] sm:$0xff]
        %v446 = vlaneseq
        %v447 = vshrl.u32 %v446, 7
        %v448 = vlaneseq
        %v449 = vand.u32 %v448, 127
        %v450 = vstv %s444
        %vm451 = vcmp.lt.s32.totalorder %v447, %v450
        %vm452 = vcmp.lt.s32.totalorder %v449, %v450
        %vm453 = vmand %vm451, %vm452
        %v454 = vpack.c.bf16 %v445, %v445
        %v455 = vld [vmem:[%s2] sm:$0xf]
        %v456 = vld [vmem:[%s2 + $0x4] sm:$0xf]
        %v457 = vld [vmem:[%s2 + $0x8] sm:$0xf]
        %v458 = vld [vmem:[%s2 + $0xc] sm:$0xf]
        %v459 = vld [vmem:[%s3] sm:$0x1]
        %v461 = vlaneseq
        %v462 = vshrl.u32 %v461, 7
        %v463 = vsub.s32 0, %v462
        %v464 = vrot.slane %v459, %v463
        %v470 = vunpack.c.l.b16 %v455
        %v471 = vunpack.c.l.b16 %v456
        %v472 = vunpack.c.l.b16 %v457
        %v473 = vunpack.c.l.b16 %v458
        %v474 = vpack.c.b16 %v471, %v470
        %v475 = vpack.c.b16 %v473, %v472
        %vm478 = vcmask 261120
        %v480 = vsel %vm478, %v454, 0
        %482 = vmatprep.subr.bf16.mxu0 0
        %483 = vmatpush1.bf16.msra.mxu0 0
        %484 = vmatprep.subr.bf16.mxu0 0
        %485 = vmatpush1.bf16.msra.mxu0 0
        %486 = vmatprep.subr.bf16.mxu0 0
        %487 = vmatpush1.bf16.msra.mxu0 0
        %488 = vmatprep.subr.bf16.mxu0 0
        %489 = vmatpush1.bf16.msra.mxu0 0
        %490 = vmatprep.subr.bf16.mxu0 0
        %491 = vmatpush1.bf16.msra.mxu0 0
        %492 = vmatprep.subr.bf16.mxu0 0
        %493 = vmatpush1.bf16.msra.mxu0 0
        %494 = vmatprep.subr.bf16.mxu0 0
        %495 = vmatpush1.bf16.msra.mxu0 %v475
        %496 = vmatprep.subr.bf16.mxu0 0
        %497 = vmatpush1.bf16.msra.mxu0 %v474
        %498 = vmatprep.subr.bf16.mxu0 0
        %499 = vmatpush2.bf16.msra.mxu0 0
        %500 = vmatprep.subr.bf16.mxu0 0
        %501 = vmatpush2.bf16.msra.mxu0 0
        %502 = vmatprep.subr.bf16.mxu0 0
        %503 = vmatpush2.bf16.msra.mxu0 0
        %504 = vmatprep.subr.bf16.mxu0 0
        %505 = vmatpush2.bf16.msra.mxu0 0
        %506 = vmatprep.subr.bf16.mxu0 0
        %507 = vmatpush2.bf16.msra.mxu0 0
        %508 = vmatprep.subr.bf16.mxu0 0
        %509 = vmatpush2.bf16.msra.mxu0 0
        %510 = vmatprep.subr.bf16.mxu0 0
        %511 = vmatpush2.bf16.msra.mxu0 0
        %512 = vmatprep.subr.bf16.mxu0 0
        %513 = vmatpush2.bf16.msra.mxu0 0
        %514 = vmatprep.mubr.bf16.mxu0 0
        %515 = vmatmul.mubr.bf16.gmra.mxu0 %v480
        %v516 = vpop.f32.mrf.mxu0
        %v517 = vadd.f32 %v464, %v516
        %v518 = vpop.f32.mrf.mxu0
        %v519 = vpop.f32.mrf.mxu0
        %v520 = vpop.f32.mrf.mxu0
        %521 = vdwg.mxu0
        %v522 = vpack.c.bf16 %v517, %v517
        %524 = vrot.lane.b32.xlu0 %v522, 96
        %v525 = vpop.permute.xlu0 %524
        %vm526 = vcmask 130048
        %v528 = vsel %vm526, %v522, 0
        %v531 = vsel %vm526, %v525, 0
        %533 = vmatprep.subr.bf16.mxu0 0
        %534 = vmatpush1.bf16.xpose.msra.mxu0 0
        %535 = vmatprep.subr.bf16.mxu0 0
        %536 = vmatpush1.bf16.xpose.msra.mxu0 0
        %537 = vmatprep.subr.bf16.mxu0 0
        %538 = vmatpush1.bf16.xpose.msra.mxu0 0
        %539 = vmatprep.subr.bf16.mxu0 0
        %540 = vmatpush1.bf16.xpose.msra.mxu0 0
        %541 = vmatprep.subr.bf16.mxu0 0
        %542 = vmatpush1.bf16.xpose.msra.mxu0 0
        %543 = vmatprep.subr.bf16.mxu0 0
        %544 = vmatpush1.bf16.xpose.msra.mxu0 0
        %545 = vmatprep.subr.bf16.mxu0 0
        %546 = vmatpush1.bf16.xpose.msra.mxu0 0
        %547 = vmatprep.subr.bf16.mxu0 0
        %548 = vmatpush1.bf16.xpose.msra.mxu0 %v531
        %549 = vmatprep.subr.bf16.mxu0 0
        %550 = vmatpush2.bf16.xpose.msra.mxu0 0
        %551 = vmatprep.subr.bf16.mxu0 0
        %552 = vmatpush2.bf16.xpose.msra.mxu0 0
        %553 = vmatprep.subr.bf16.mxu0 0
        %554 = vmatpush2.bf16.xpose.msra.mxu0 0
        %555 = vmatprep.subr.bf16.mxu0 0
        %556 = vmatpush2.bf16.xpose.msra.mxu0 0
        %557 = vmatprep.subr.bf16.mxu0 0
        %558 = vmatpush2.bf16.xpose.msra.mxu0 0
        %559 = vmatprep.subr.bf16.mxu0 0
        %560 = vmatpush2.bf16.xpose.msra.mxu0 0
        %561 = vmatprep.subr.bf16.mxu0 0
        %562 = vmatpush2.bf16.xpose.msra.mxu0 0
        %563 = vmatprep.subr.bf16.mxu0 0
        %564 = vmatpush2.bf16.xpose.msra.mxu0 0
        %565 = vmatprep.mubr.bf16.mxu0 0
        %566 = vmatmul.mubr.bf16.gmra.mxu0 %v528
        %v567 = vpop.f32.mrf.mxu0
        %v568 = vadd.f32 0.0, %v567
        %v569 = vpop.f32.mrf.mxu0
        %v570 = vpop.f32.mrf.mxu0
        %v571 = vpop.f32.mrf.mxu0
        %572 = vdwg.mxu0
        %v573 = vsel %vm453, %v568, -1e+09
        %vm574 = vcmask 64512
        %v575 = vsel %vm574, %v573, -inf
        %576 = vmax.xlane.f32.xlu0 %v575
        %v577 = vpop.xlane.xlu0 %576
        %v578 = vsub.f32 %v573, %v577
        %v579 = vmul.f32 %v578, 1.442695
        %v580 = vpow.pop %v579
        %v581 = vsel %vm574, %v580, 0.0
        %582 = vadd.xlane.f32.xlu0 %v581
        %v583 = vpop.xlane.xlu0 %582
        %v584 = vpack.c.bf16 %v580, %v580
        %585 = vrot.lane.b32.xlu0 %v522, 64
        %v586 = vpop.permute.xlu0 %585
        %v588 = vsel %vm574, %v584, 0
        %vm590 = vcmask 1043456
        %v592 = vsel %vm590, %v586, 0
        %594 = vmatprep.subr.bf16.mxu0 0
        %595 = vmatpush1.bf16.msra.mxu0 0
        %596 = vmatprep.subr.bf16.mxu0 0
        %597 = vmatpush1.bf16.msra.mxu0 0
        %598 = vmatprep.subr.bf16.mxu0 0
        %599 = vmatpush1.bf16.msra.mxu0 0
        %600 = vmatprep.subr.bf16.mxu0 0
        %601 = vmatpush1.bf16.msra.mxu0 0
        %602 = vmatprep.subr.bf16.mxu0 0
        %603 = vmatpush1.bf16.msra.mxu0 0
        %604 = vmatprep.subr.bf16.mxu0 0
        %605 = vmatpush1.bf16.msra.mxu0 0
        %606 = vmatprep.subr.bf16.mxu0 0
        %607 = vmatpush1.bf16.msra.mxu0 0
        %608 = vmatprep.subr.bf16.mxu0 0
        %609 = vmatpush1.bf16.msra.mxu0 %v592
        %610 = vmatprep.subr.bf16.mxu0 0
        %611 = vmatpush2.bf16.msra.mxu0 0
        %612 = vmatprep.subr.bf16.mxu0 0
        %613 = vmatpush2.bf16.msra.mxu0 0
        %614 = vmatprep.subr.bf16.mxu0 0
        %615 = vmatpush2.bf16.msra.mxu0 0
        %616 = vmatprep.subr.bf16.mxu0 0
        %617 = vmatpush2.bf16.msra.mxu0 0
        %618 = vmatprep.subr.bf16.mxu0 0
        %619 = vmatpush2.bf16.msra.mxu0 0
        %620 = vmatprep.subr.bf16.mxu0 0
        %621 = vmatpush2.bf16.msra.mxu0 0
        %622 = vmatprep.subr.bf16.mxu0 0
        %623 = vmatpush2.bf16.msra.mxu0 0
        %624 = vmatprep.subr.bf16.mxu0 0
        %625 = vmatpush2.bf16.msra.mxu0 0
        %626 = vmatprep.mubr.bf16.mxu0 0
        %627 = vmatmul.mubr.bf16.gmra.mxu0 %v588
        %v628 = vpop.f32.mrf.mxu0
        %v629 = vadd.f32 0.0, %v628
        %v630 = vpop.f32.mrf.mxu0
        %v631 = vpop.f32.mrf.mxu0
        %v632 = vpop.f32.mrf.mxu0
        %633 = vdwg.mxu0
        %v634 = vrcp.pop %v583
        %v635 = vmul.f32 %v629, %v634
        %636 = vrot.lane.b32.xlu0 %v522, 112
        %v637 = vpop.permute.xlu0 %636
        %638 = vrot.lane.b32.xlu0 %v522, 80
        %v639 = vpop.permute.xlu0 %638
        %v641 = vsel %vm526, %v637, 0
        %v644 = vsel %vm526, %v639, 0
        %646 = vmatprep.subr.bf16.mxu0 0
        %647 = vmatpush1.bf16.xpose.msra.mxu0 0
        %648 = vmatprep.subr.bf16.mxu0 0
        %649 = vmatpush1.bf16.xpose.msra.mxu0 0
        %650 = vmatprep.subr.bf16.mxu0 0
        %651 = vmatpush1.bf16.xpose.msra.mxu0 0
        %652 = vmatprep.subr.bf16.mxu0 0
        %653 = vmatpush1.bf16.xpose.msra.mxu0 0
        %654 = vmatprep.subr.bf16.mxu0 0
        %655 = vmatpush1.bf16.xpose.msra.mxu0 0
        %656 = vmatprep.subr.bf16.mxu0 0
        %657 = vmatpush1.bf16.xpose.msra.mxu0 0
        %658 = vmatprep.subr.bf16.mxu0 0
        %659 = vmatpush1.bf16.xpose.msra.mxu0 0
        %660 = vmatprep.subr.bf16.mxu0 0
        %661 = vmatpush1.bf16.xpose.msra.mxu0 %v644
        %662 = vmatprep.subr.bf16.mxu0 0
        %663 = vmatpush2.bf16.xpose.msra.mxu0 0
        %664 = vmatprep.subr.bf16.mxu0 0
        %665 = vmatpush2.bf16.xpose.msra.mxu0 0
        %666 = vmatprep.subr.bf16.mxu0 0
        %667 = vmatpush2.bf16.xpose.msra.mxu0 0
        %668 = vmatprep.subr.bf16.mxu0 0
        %669 = vmatpush2.bf16.xpose.msra.mxu0 0
        %670 = vmatprep.subr.bf16.mxu0 0
        %671 = vmatpush2.bf16.xpose.msra.mxu0 0
        %672 = vmatprep.subr.bf16.mxu0 0
        %673 = vmatpush2.bf16.xpose.msra.mxu0 0
        %674 = vmatprep.subr.bf16.mxu0 0
        %675 = vmatpush2.bf16.xpose.msra.mxu0 0
        %676 = vmatprep.subr.bf16.mxu0 0
        %677 = vmatpush2.bf16.xpose.msra.mxu0 0
        %678 = vmatprep.mubr.bf16.mxu0 0
        %679 = vmatmul.mubr.bf16.gmra.mxu0 %v641
        %v680 = vpop.f32.mrf.mxu0
        %v681 = vadd.f32 0.0, %v680
        %v682 = vpop.f32.mrf.mxu0
        %v683 = vpop.f32.mrf.mxu0
        %v684 = vpop.f32.mrf.mxu0
        %685 = vdwg.mxu0
        %v686 = vsel %vm453, %v681, -1e+09
        %v687 = vsel %vm574, %v686, -inf
        %688 = vmax.xlane.f32.xlu0 %v687
        %v689 = vpop.xlane.xlu0 %688
        %v690 = vsub.f32 %v686, %v689
        %v691 = vmul.f32 %v690, 1.442695
        %v692 = vpow.pop %v691
        %v693 = vsel %vm574, %v692, 0.0
        %694 = vadd.xlane.f32.xlu0 %v693
        %v695 = vpop.xlane.xlu0 %694
        %v696 = vpack.c.bf16 %v692, %v692
        %697 = vrot.lane.b32.xlu0 %v522, 48
        %v698 = vpop.permute.xlu0 %697
        %v700 = vsel %vm574, %v696, 0
        %v703 = vsel %vm590, %v698, 0
        %705 = vmatprep.subr.bf16.mxu0 0
        %706 = vmatpush1.bf16.msra.mxu0 0
        %707 = vmatprep.subr.bf16.mxu0 0
        %708 = vmatpush1.bf16.msra.mxu0 0
        %709 = vmatprep.subr.bf16.mxu0 0
        %710 = vmatpush1.bf16.msra.mxu0 0
        %711 = vmatprep.subr.bf16.mxu0 0
        %712 = vmatpush1.bf16.msra.mxu0 0
        %713 = vmatprep.subr.bf16.mxu0 0
        %714 = vmatpush1.bf16.msra.mxu0 0
        %715 = vmatprep.subr.bf16.mxu0 0
        %716 = vmatpush1.bf16.msra.mxu0 0
        %717 = vmatprep.subr.bf16.mxu0 0
        %718 = vmatpush1.bf16.msra.mxu0 0
        %719 = vmatprep.subr.bf16.mxu0 0
        %720 = vmatpush1.bf16.msra.mxu0 %v703
        %721 = vmatprep.subr.bf16.mxu0 0
        %722 = vmatpush2.bf16.msra.mxu0 0
        %723 = vmatprep.subr.bf16.mxu0 0
        %724 = vmatpush2.bf16.msra.mxu0 0
        %725 = vmatprep.subr.bf16.mxu0 0
        %726 = vmatpush2.bf16.msra.mxu0 0
        %727 = vmatprep.subr.bf16.mxu0 0
        %728 = vmatpush2.bf16.msra.mxu0 0
        %729 = vmatprep.subr.bf16.mxu0 0
        %730 = vmatpush2.bf16.msra.mxu0 0
        %731 = vmatprep.subr.bf16.mxu0 0
        %732 = vmatpush2.bf16.msra.mxu0 0
        %733 = vmatprep.subr.bf16.mxu0 0
        %734 = vmatpush2.bf16.msra.mxu0 0
        %735 = vmatprep.subr.bf16.mxu0 0
        %736 = vmatpush2.bf16.msra.mxu0 0
        %737 = vmatprep.mubr.bf16.mxu0 0
        %738 = vmatmul.mubr.bf16.gmra.mxu0 %v700
        %v739 = vpop.f32.mrf.mxu0
        %v740 = vadd.f32 0.0, %v739
        %v741 = vpop.f32.mrf.mxu0
        %v742 = vpop.f32.mrf.mxu0
        %v743 = vpop.f32.mrf.mxu0
        %744 = vdwg.mxu0
        %v745 = vrcp.pop %v695
        %v746 = vmul.f32 %v740, %v745
        %v747 = vld [vmem:[%s4] sm:$0xf]
        %v748 = vld [vmem:[%s4 + $0x4] sm:$0xf]
        %v749 = vpack.c.bf16 %v635, %v635
        %v750 = vld [vmem:[%s4 + $0x8] sm:$0xf]
        %v751 = vld [vmem:[%s4 + $0xc] sm:$0xf]
        %v752 = vpack.c.bf16 %v746, %v746
        %v755 = vunpack.c.l.b16 %v750
        %v756 = vunpack.c.l.b16 %v751
        %v757 = vpack.c.b16 %v756, %v755
        %v760 = vsel %vm526, %v752, 0
        %762 = vmatprep.subr.bf16.mxu0 0
        %763 = vmatpush1.bf16.msra.mxu0 0
        %764 = vmatprep.subr.bf16.mxu0 0
        %765 = vmatpush1.bf16.msra.mxu0 0
        %766 = vmatprep.subr.bf16.mxu0 0
        %767 = vmatpush1.bf16.msra.mxu0 0
        %768 = vmatprep.subr.bf16.mxu0 0
        %769 = vmatpush1.bf16.msra.mxu0 0
        %770 = vmatprep.subr.bf16.mxu0 0
        %771 = vmatpush1.bf16.msra.mxu0 0
        %772 = vmatprep.subr.bf16.mxu0 0
        %773 = vmatpush1.bf16.msra.mxu0 0
        %774 = vmatprep.subr.bf16.mxu0 0
        %775 = vmatpush1.bf16.msra.mxu0 0
        %776 = vmatprep.subr.bf16.mxu0 0
        %777 = vmatpush1.bf16.msra.mxu0 %v757
        %778 = vmatprep.subr.bf16.mxu0 0
        %779 = vmatpush2.bf16.msra.mxu0 0
        %780 = vmatprep.subr.bf16.mxu0 0
        %781 = vmatpush2.bf16.msra.mxu0 0
        %782 = vmatprep.subr.bf16.mxu0 0
        %783 = vmatpush2.bf16.msra.mxu0 0
        %784 = vmatprep.subr.bf16.mxu0 0
        %785 = vmatpush2.bf16.msra.mxu0 0
        %786 = vmatprep.subr.bf16.mxu0 0
        %787 = vmatpush2.bf16.msra.mxu0 0
        %788 = vmatprep.subr.bf16.mxu0 0
        %789 = vmatpush2.bf16.msra.mxu0 0
        %790 = vmatprep.subr.bf16.mxu0 0
        %791 = vmatpush2.bf16.msra.mxu0 0
        %792 = vmatprep.subr.bf16.mxu0 0
        %793 = vmatpush2.bf16.msra.mxu0 0
        %794 = vmatprep.mubr.bf16.mxu0 0
        %795 = vmatmul.mubr.bf16.gmra.mxu0 %v760
        %v796 = vpop.f32.mrf.mxu0
        %v797 = vadd.f32 0.0, %v796
        %v798 = vpop.f32.mrf.mxu0
        %v799 = vpop.f32.mrf.mxu0
        %v800 = vpop.f32.mrf.mxu0
        %801 = vdwg.mxu0
        %v804 = vunpack.c.l.b16 %v747
        %v805 = vunpack.c.l.b16 %v748
        %v806 = vpack.c.b16 %v805, %v804
        %v809 = vsel %vm526, %v749, 0
        %811 = vmatprep.subr.bf16.mxu0 0
        %812 = vmatpush1.bf16.msra.mxu0 0
        %813 = vmatprep.subr.bf16.mxu0 0
        %814 = vmatpush1.bf16.msra.mxu0 0
        %815 = vmatprep.subr.bf16.mxu0 0
        %816 = vmatpush1.bf16.msra.mxu0 0
        %817 = vmatprep.subr.bf16.mxu0 0
        %818 = vmatpush1.bf16.msra.mxu0 0
        %819 = vmatprep.subr.bf16.mxu0 0
        %820 = vmatpush1.bf16.msra.mxu0 0
        %821 = vmatprep.subr.bf16.mxu0 0
        %822 = vmatpush1.bf16.msra.mxu0 0
        %823 = vmatprep.subr.bf16.mxu0 0
        %824 = vmatpush1.bf16.msra.mxu0 0
        %825 = vmatprep.subr.bf16.mxu0 0
        %826 = vmatpush1.bf16.msra.mxu0 %v806
        %827 = vmatprep.subr.bf16.mxu0 0
        %828 = vmatpush2.bf16.msra.mxu0 0
        %829 = vmatprep.subr.bf16.mxu0 0
        %830 = vmatpush2.bf16.msra.mxu0 0
        %831 = vmatprep.subr.bf16.mxu0 0
        %832 = vmatpush2.bf16.msra.mxu0 0
        %833 = vmatprep.subr.bf16.mxu0 0
        %834 = vmatpush2.bf16.msra.mxu0 0
        %835 = vmatprep.subr.bf16.mxu0 0
        %836 = vmatpush2.bf16.msra.mxu0 0
        %837 = vmatprep.subr.bf16.mxu0 0
        %838 = vmatpush2.bf16.msra.mxu0 0
        %839 = vmatprep.subr.bf16.mxu0 0
        %840 = vmatpush2.bf16.msra.mxu0 0
        %841 = vmatprep.subr.bf16.mxu0 0
        %842 = vmatpush2.bf16.msra.mxu0 0
        %843 = vmatprep.mubr.bf16.mxu0 0
        %844 = vmatmul.mubr.bf16.gmra.mxu0 %v809
        %v845 = vpop.f32.mrf.mxu0
        %v846 = vadd.f32 %v797, %v845
        %v847 = vpop.f32.mrf.mxu0
        %v848 = vpop.f32.mrf.mxu0
        %v849 = vpop.f32.mrf.mxu0
        %850 = vdwg.mxu0
        %v851 = vld [vmem:[%s5] sm:$0x1]
        %v853 = vlaneseq
        %v854 = vshrl.u32 %v853, 7
        %v855 = vsub.s32 0, %v854
        %v856 = vrot.slane %v851, %v855
        %v858 = vadd.f32 %v846, %v856
        %v859 = vadd.f32 %v858, %v445
        %v860 = vld [vmem:[%s6] sm:$0x1]
        %v861 = vld [vmem:[%s7] sm:$0x1]
        %v862 = vsel %vm478, %v859, 0.0
        %863 = vadd.xlane.f32.xlu0 %v862
        %v864 = vpop.xlane.xlu0 %863
        %v865 = vrcp.pop 32.0
        %v866 = vmul.f32 %v864, %v865
        %v867 = vsub.f32 %v859, %v866
        %v868 = vmul.f32 %v867, %v867
        %v869 = vsel %vm478, %v868, 0.0
        %870 = vadd.xlane.f32.xlu0 %v869
        %v871 = vpop.xlane.xlu0 %870
        %v872 = vmul.f32 %v871, %v865
        %v873 = vadd.f32 %v872, 1e-05
        %v874 = vrsqrt.pop %v873
        %v875 = vmul.f32 %v867, %v874
        %v877 = vlaneseq
        %v878 = vshrl.u32 %v877, 7
        %v879 = vsub.s32 0, %v878
        %v880 = vrot.slane %v860, %v879
        %v882 = vmul.f32 %v875, %v880
        %v884 = vlaneseq
        %v885 = vshrl.u32 %v884, 7
        %v886 = vsub.s32 0, %v885
        %v887 = vrot.slane %v861, %v886
        %v889 = vadd.f32 %v882, %v887
        %v890 = vadd.s32 %v447, 4294967295
        %vm891 = vcmp.ge.s32.totalorder %v890, 0
        %vm892 = vcmp.lt.s32.totalorder %v890, 8
        %vm893 = vmand %vm891, %vm892
        %v894 = vadd.s32 %v447, 1
        %vm895 = vcmp.ge.s32.totalorder %v894, 0
        %vm896 = vcmp.lt.s32.totalorder %v894, 8
        %vm897 = vmand %vm895, %vm896
        %v898 = vrot.slane %v889, 7
        %v899 = vsel %vm893, 1, 0
        %vm900 = vcmp.eq.s32.totalorder %v899, 1
        %v901 = vsel %vm900, %v898, 0.0
        %v902 = vpack.c.bf16 %v901, %v901
        %v903 = vld [vmem:[%s8] sm:$0xf]
        %v904 = vld [vmem:[%s8 + $0x4] sm:$0xf]
        %v905 = vld [vmem:[%s8 + $0x8] sm:$0xf]
        %v906 = vld [vmem:[%s8 + $0xc] sm:$0xf]
        %v907 = vpack.c.bf16 %v889, %v889
        %s908 = scalar_lea.vmem %s8, 16
        %v909 = vld [vmem:[%s908] sm:$0xf]
        %v910 = vld [vmem:[%s908 + $0x4] sm:$0xf]
        %v911 = vld [vmem:[%s908 + $0x8] sm:$0xf]
        %v912 = vld [vmem:[%s908 + $0xc] sm:$0xf]
        %v917 = vunpack.c.l.b16 %v909
        %v918 = vunpack.c.l.b16 %v910
        %v919 = vunpack.c.l.b16 %v911
        %v920 = vunpack.c.l.b16 %v912
        %v921 = vpack.c.b16 %v918, %v917
        %v922 = vpack.c.b16 %v920, %v919
        %v926 = vsel %vm478, %v907, 0
        %928 = vmatprep.subr.bf16.mxu0 0
        %929 = vmatpush1.bf16.msra.mxu0 0
        %930 = vmatprep.subr.bf16.mxu0 0
        %931 = vmatpush1.bf16.msra.mxu0 0
        %932 = vmatprep.subr.bf16.mxu0 0
        %933 = vmatpush1.bf16.msra.mxu0 0
        %934 = vmatprep.subr.bf16.mxu0 0
        %935 = vmatpush1.bf16.msra.mxu0 0
        %936 = vmatprep.subr.bf16.mxu0 0
        %937 = vmatpush1.bf16.msra.mxu0 0
        %938 = vmatprep.subr.bf16.mxu0 0
        %939 = vmatpush1.bf16.msra.mxu0 0
        %940 = vmatprep.subr.bf16.mxu0 0
        %941 = vmatpush1.bf16.msra.mxu0 %v922
        %942 = vmatprep.subr.bf16.mxu0 0
        %943 = vmatpush1.bf16.msra.mxu0 %v921
        %944 = vmatprep.subr.bf16.mxu0 0
        %945 = vmatpush2.bf16.msra.mxu0 0
        %946 = vmatprep.subr.bf16.mxu0 0
        %947 = vmatpush2.bf16.msra.mxu0 0
        %948 = vmatprep.subr.bf16.mxu0 0
        %949 = vmatpush2.bf16.msra.mxu0 0
        %950 = vmatprep.subr.bf16.mxu0 0
        %951 = vmatpush2.bf16.msra.mxu0 0
        %952 = vmatprep.subr.bf16.mxu0 0
        %953 = vmatpush2.bf16.msra.mxu0 0
        %954 = vmatprep.subr.bf16.mxu0 0
        %955 = vmatpush2.bf16.msra.mxu0 0
        %956 = vmatprep.subr.bf16.mxu0 0
        %957 = vmatpush2.bf16.msra.mxu0 0
        %958 = vmatprep.subr.bf16.mxu0 0
        %959 = vmatpush2.bf16.msra.mxu0 0
        %960 = vmatprep.mubr.bf16.mxu0 0
        %961 = vmatmul.mubr.bf16.gmra.mxu0 %v926
        %v962 = vpop.f32.mrf.mxu0
        %v963 = vadd.f32 0.0, %v962
        %v964 = vpop.f32.mrf.mxu0
        %v965 = vpop.f32.mrf.mxu0
        %v966 = vpop.f32.mrf.mxu0
        %967 = vdwg.mxu0
        %v972 = vunpack.c.l.b16 %v903
        %v973 = vunpack.c.l.b16 %v904
        %v974 = vunpack.c.l.b16 %v905
        %v975 = vunpack.c.l.b16 %v906
        %v976 = vpack.c.b16 %v973, %v972
        %v977 = vpack.c.b16 %v975, %v974
        %v981 = vsel %vm478, %v902, 0
        %983 = vmatprep.subr.bf16.mxu0 0
        %984 = vmatpush1.bf16.msra.mxu0 0
        %985 = vmatprep.subr.bf16.mxu0 0
        %986 = vmatpush1.bf16.msra.mxu0 0
        %987 = vmatprep.subr.bf16.mxu0 0
        %988 = vmatpush1.bf16.msra.mxu0 0
        %989 = vmatprep.subr.bf16.mxu0 0
        %990 = vmatpush1.bf16.msra.mxu0 0
        %991 = vmatprep.subr.bf16.mxu0 0
        %992 = vmatpush1.bf16.msra.mxu0 0
        %993 = vmatprep.subr.bf16.mxu0 0
        %994 = vmatpush1.bf16.msra.mxu0 0
        %995 = vmatprep.subr.bf16.mxu0 0
        %996 = vmatpush1.bf16.msra.mxu0 %v977
        %997 = vmatprep.subr.bf16.mxu0 0
        %998 = vmatpush1.bf16.msra.mxu0 %v976
        %999 = vmatprep.subr.bf16.mxu0 0
        %1000 = vmatpush2.bf16.msra.mxu0 0
        %1001 = vmatprep.subr.bf16.mxu0 0
        %1002 = vmatpush2.bf16.msra.mxu0 0
        %1003 = vmatprep.subr.bf16.mxu0 0
        %1004 = vmatpush2.bf16.msra.mxu0 0
        %1005 = vmatprep.subr.bf16.mxu0 0
        %1006 = vmatpush2.bf16.msra.mxu0 0
        %1007 = vmatprep.subr.bf16.mxu0 0
        %1008 = vmatpush2.bf16.msra.mxu0 0
        %1009 = vmatprep.subr.bf16.mxu0 0
        %1010 = vmatpush2.bf16.msra.mxu0 0
        %1011 = vmatprep.subr.bf16.mxu0 0
        %1012 = vmatpush2.bf16.msra.mxu0 0
        %1013 = vmatprep.subr.bf16.mxu0 0
        %1014 = vmatpush2.bf16.msra.mxu0 0
        %1015 = vmatprep.mubr.bf16.mxu0 0
        %1016 = vmatmul.mubr.bf16.gmra.mxu0 %v981
        %v1017 = vpop.f32.mrf.mxu0
        %v1018 = vadd.f32 %v963, %v1017
        %v1019 = vpop.f32.mrf.mxu0
        %v1020 = vpop.f32.mrf.mxu0
        %v1021 = vpop.f32.mrf.mxu0
        %1022 = vdwg.mxu0
        %v1023 = vrot.slane %v889, 1
        %v1024 = vsel %vm897, 1, 0
        %vm1025 = vcmp.eq.s32.totalorder %v1024, 1
        %v1026 = vsel %vm1025, %v1023, 0.0
        %v1027 = vpack.c.bf16 %v1026, %v1026
        %s1028 = scalar_lea.vmem %s8, 32
        %v1029 = vld [vmem:[%s1028] sm:$0xf]
        %v1030 = vld [vmem:[%s1028 + $0x4] sm:$0xf]
        %v1031 = vld [vmem:[%s1028 + $0x8] sm:$0xf]
        %v1032 = vld [vmem:[%s1028 + $0xc] sm:$0xf]
        %v1037 = vunpack.c.l.b16 %v1029
        %v1038 = vunpack.c.l.b16 %v1030
        %v1039 = vunpack.c.l.b16 %v1031
        %v1040 = vunpack.c.l.b16 %v1032
        %v1041 = vpack.c.b16 %v1038, %v1037
        %v1042 = vpack.c.b16 %v1040, %v1039
        %v1046 = vsel %vm478, %v1027, 0
        %1048 = vmatprep.subr.bf16.mxu0 0
        %1049 = vmatpush1.bf16.msra.mxu0 0
        %1050 = vmatprep.subr.bf16.mxu0 0
        %1051 = vmatpush1.bf16.msra.mxu0 0
        %1052 = vmatprep.subr.bf16.mxu0 0
        %1053 = vmatpush1.bf16.msra.mxu0 0
        %1054 = vmatprep.subr.bf16.mxu0 0
        %1055 = vmatpush1.bf16.msra.mxu0 0
        %1056 = vmatprep.subr.bf16.mxu0 0
        %1057 = vmatpush1.bf16.msra.mxu0 0
        %1058 = vmatprep.subr.bf16.mxu0 0
        %1059 = vmatpush1.bf16.msra.mxu0 0
        %1060 = vmatprep.subr.bf16.mxu0 0
        %1061 = vmatpush1.bf16.msra.mxu0 %v1042
        %1062 = vmatprep.subr.bf16.mxu0 0
        %1063 = vmatpush1.bf16.msra.mxu0 %v1041
        %1064 = vmatprep.subr.bf16.mxu0 0
        %1065 = vmatpush2.bf16.msra.mxu0 0
        %1066 = vmatprep.subr.bf16.mxu0 0
        %1067 = vmatpush2.bf16.msra.mxu0 0
        %1068 = vmatprep.subr.bf16.mxu0 0
        %1069 = vmatpush2.bf16.msra.mxu0 0
        %1070 = vmatprep.subr.bf16.mxu0 0
        %1071 = vmatpush2.bf16.msra.mxu0 0
        %1072 = vmatprep.subr.bf16.mxu0 0
        %1073 = vmatpush2.bf16.msra.mxu0 0
        %1074 = vmatprep.subr.bf16.mxu0 0
        %1075 = vmatpush2.bf16.msra.mxu0 0
        %1076 = vmatprep.subr.bf16.mxu0 0
        %1077 = vmatpush2.bf16.msra.mxu0 0
        %1078 = vmatprep.subr.bf16.mxu0 0
        %1079 = vmatpush2.bf16.msra.mxu0 0
        %1080 = vmatprep.mubr.bf16.mxu0 0
        %1081 = vmatmul.mubr.bf16.gmra.mxu0 %v1046
        %v1082 = vpop.f32.mrf.mxu0
        %v1083 = vadd.f32 0.0, %v1082
        %v1084 = vpop.f32.mrf.mxu0
        %v1085 = vpop.f32.mrf.mxu0
        %v1086 = vpop.f32.mrf.mxu0
        %1087 = vdwg.mxu0
        %v1088 = vadd.f32 %v1018, %v1083
        %v1089 = vld [vmem:[%s9] sm:$0x1]
        %v1091 = vlaneseq
        %v1092 = vshrl.u32 %v1091, 7
        %v1093 = vsub.s32 0, %v1092
        %v1094 = vrot.slane %v1089, %v1093
        %v1096 = vadd.f32 %v1088, %v1094
        %v1097 = vmax.f32 %v1096, 0.0
        %v1098 = vrot.slane %v1097, 7
        %v1099 = vsel %vm900, %v1098, 0.0
        %v1100 = vpack.c.bf16 %v1099, %v1099
        %v1101 = vld [vmem:[%s10] sm:$0xf]
        %v1102 = vld [vmem:[%s10 + $0x4] sm:$0xf]
        %v1103 = vld [vmem:[%s10 + $0x8] sm:$0xf]
        %v1104 = vld [vmem:[%s10 + $0xc] sm:$0xf]
        %v1105 = vld [vmem:[%s10 + $0x10] sm:$0xf]
        %v1106 = vld [vmem:[%s10 + $0x14] sm:$0xf]
        %v1107 = vld [vmem:[%s10 + $0x18] sm:$0xf]
        %v1108 = vld [vmem:[%s10 + $0x1c] sm:$0xf]
        %v1109 = vpack.c.bf16 %v1097, %v1097
        %s1110 = scalar_lea.vmem %s10, 32
        %v1111 = vld [vmem:[%s1110] sm:$0xf]
        %v1112 = vld [vmem:[%s1110 + $0x4] sm:$0xf]
        %v1113 = vld [vmem:[%s1110 + $0x8] sm:$0xf]
        %v1114 = vld [vmem:[%s1110 + $0xc] sm:$0xf]
        %v1115 = vld [vmem:[%s1110 + $0x10] sm:$0xf]
        %v1116 = vld [vmem:[%s1110 + $0x14] sm:$0xf]
        %v1117 = vld [vmem:[%s1110 + $0x18] sm:$0xf]
        %v1118 = vld [vmem:[%s1110 + $0x1c] sm:$0xf]
        %v1127 = vunpack.c.l.b16 %v1111
        %v1128 = vunpack.c.l.b16 %v1112
        %v1129 = vunpack.c.l.b16 %v1113
        %v1130 = vunpack.c.l.b16 %v1114
        %v1131 = vunpack.c.l.b16 %v1115
        %v1132 = vunpack.c.l.b16 %v1116
        %v1133 = vunpack.c.l.b16 %v1117
        %v1134 = vunpack.c.l.b16 %v1118
        %v1135 = vpack.c.b16 %v1128, %v1127
        %v1136 = vpack.c.b16 %v1130, %v1129
        %v1137 = vpack.c.b16 %v1132, %v1131
        %v1138 = vpack.c.b16 %v1134, %v1133
        %vm1143 = vcmask 523264
        %v1145 = vsel %vm1143, %v1109, 0
        %1147 = vmatprep.subr.bf16.mxu0 0
        %1148 = vmatpush1.bf16.msra.mxu0 0
        %1149 = vmatprep.subr.bf16.mxu0 0
        %1150 = vmatpush1.bf16.msra.mxu0 0
        %1151 = vmatprep.subr.bf16.mxu0 0
        %1152 = vmatpush1.bf16.msra.mxu0 0
        %1153 = vmatprep.subr.bf16.mxu0 0
        %1154 = vmatpush1.bf16.msra.mxu0 0
        %1155 = vmatprep.subr.bf16.mxu0 0
        %1156 = vmatpush1.bf16.msra.mxu0 %v1138
        %1157 = vmatprep.subr.bf16.mxu0 0
        %1158 = vmatpush1.bf16.msra.mxu0 %v1137
        %1159 = vmatprep.subr.bf16.mxu0 0
        %1160 = vmatpush1.bf16.msra.mxu0 %v1136
        %1161 = vmatprep.subr.bf16.mxu0 0
        %1162 = vmatpush1.bf16.msra.mxu0 %v1135
        %1163 = vmatprep.subr.bf16.mxu0 0
        %1164 = vmatpush2.bf16.msra.mxu0 0
        %1165 = vmatprep.subr.bf16.mxu0 0
        %1166 = vmatpush2.bf16.msra.mxu0 0
        %1167 = vmatprep.subr.bf16.mxu0 0
        %1168 = vmatpush2.bf16.msra.mxu0 0
        %1169 = vmatprep.subr.bf16.mxu0 0
        %1170 = vmatpush2.bf16.msra.mxu0 0
        %1171 = vmatprep.subr.bf16.mxu0 0
        %1172 = vmatpush2.bf16.msra.mxu0 0
        %1173 = vmatprep.subr.bf16.mxu0 0
        %1174 = vmatpush2.bf16.msra.mxu0 0
        %1175 = vmatprep.subr.bf16.mxu0 0
        %1176 = vmatpush2.bf16.msra.mxu0 0
        %1177 = vmatprep.subr.bf16.mxu0 0
        %1178 = vmatpush2.bf16.msra.mxu0 0
        %1179 = vmatprep.mubr.bf16.mxu0 0
        %1180 = vmatmul.mubr.bf16.gmra.mxu0 %v1145
        %v1181 = vpop.f32.mrf.mxu0
        %v1182 = vadd.f32 0.0, %v1181
        %v1183 = vpop.f32.mrf.mxu0
        %v1184 = vpop.f32.mrf.mxu0
        %v1185 = vpop.f32.mrf.mxu0
        %1186 = vdwg.mxu0
        %v1195 = vunpack.c.l.b16 %v1101
        %v1196 = vunpack.c.l.b16 %v1102
        %v1197 = vunpack.c.l.b16 %v1103
        %v1198 = vunpack.c.l.b16 %v1104
        %v1199 = vunpack.c.l.b16 %v1105
        %v1200 = vunpack.c.l.b16 %v1106
        %v1201 = vunpack.c.l.b16 %v1107
        %v1202 = vunpack.c.l.b16 %v1108
        %v1203 = vpack.c.b16 %v1196, %v1195
        %v1204 = vpack.c.b16 %v1198, %v1197
        %v1205 = vpack.c.b16 %v1200, %v1199
        %v1206 = vpack.c.b16 %v1202, %v1201
        %v1212 = vsel %vm1143, %v1100, 0
        %1214 = vmatprep.subr.bf16.mxu0 0
        %1215 = vmatpush1.bf16.msra.mxu0 0
        %1216 = vmatprep.subr.bf16.mxu0 0
        %1217 = vmatpush1.bf16.msra.mxu0 0
        %1218 = vmatprep.subr.bf16.mxu0 0
        %1219 = vmatpush1.bf16.msra.mxu0 0
        %1220 = vmatprep.subr.bf16.mxu0 0
        %1221 = vmatpush1.bf16.msra.mxu0 0
        %1222 = vmatprep.subr.bf16.mxu0 0
        %1223 = vmatpush1.bf16.msra.mxu0 %v1206
        %1224 = vmatprep.subr.bf16.mxu0 0
        %1225 = vmatpush1.bf16.msra.mxu0 %v1205
        %1226 = vmatprep.subr.bf16.mxu0 0
        %1227 = vmatpush1.bf16.msra.mxu0 %v1204
        %1228 = vmatprep.subr.bf16.mxu0 0
        %1229 = vmatpush1.bf16.msra.mxu0 %v1203
        %1230 = vmatprep.subr.bf16.mxu0 0
        %1231 = vmatpush2.bf16.msra.mxu0 0
        %1232 = vmatprep.subr.bf16.mxu0 0
        %1233 = vmatpush2.bf16.msra.mxu0 0
        %1234 = vmatprep.subr.bf16.mxu0 0
        %1235 = vmatpush2.bf16.msra.mxu0 0
        %1236 = vmatprep.subr.bf16.mxu0 0
        %1237 = vmatpush2.bf16.msra.mxu0 0
        %1238 = vmatprep.subr.bf16.mxu0 0
        %1239 = vmatpush2.bf16.msra.mxu0 0
        %1240 = vmatprep.subr.bf16.mxu0 0
        %1241 = vmatpush2.bf16.msra.mxu0 0
        %1242 = vmatprep.subr.bf16.mxu0 0
        %1243 = vmatpush2.bf16.msra.mxu0 0
        %1244 = vmatprep.subr.bf16.mxu0 0
        %1245 = vmatpush2.bf16.msra.mxu0 0
        %1246 = vmatprep.mubr.bf16.mxu0 0
        %1247 = vmatmul.mubr.bf16.gmra.mxu0 %v1212
        %v1248 = vpop.f32.mrf.mxu0
        %v1249 = vadd.f32 %v1182, %v1248
        %v1250 = vpop.f32.mrf.mxu0
        %v1251 = vpop.f32.mrf.mxu0
        %v1252 = vpop.f32.mrf.mxu0
        %1253 = vdwg.mxu0
        %v1254 = vrot.slane %v1097, 1
        %v1255 = vsel %vm1025, %v1254, 0.0
        %v1256 = vpack.c.bf16 %v1255, %v1255
        %s1257 = scalar_lea.vmem %s10, 64
        %v1258 = vld [vmem:[%s1257] sm:$0xf]
        %v1259 = vld [vmem:[%s1257 + $0x4] sm:$0xf]
        %v1260 = vld [vmem:[%s1257 + $0x8] sm:$0xf]
        %v1261 = vld [vmem:[%s1257 + $0xc] sm:$0xf]
        %v1262 = vld [vmem:[%s1257 + $0x10] sm:$0xf]
        %v1263 = vld [vmem:[%s1257 + $0x14] sm:$0xf]
        %v1264 = vld [vmem:[%s1257 + $0x18] sm:$0xf]
        %v1265 = vld [vmem:[%s1257 + $0x1c] sm:$0xf]
        %v1274 = vunpack.c.l.b16 %v1258
        %v1275 = vunpack.c.l.b16 %v1259
        %v1276 = vunpack.c.l.b16 %v1260
        %v1277 = vunpack.c.l.b16 %v1261
        %v1278 = vunpack.c.l.b16 %v1262
        %v1279 = vunpack.c.l.b16 %v1263
        %v1280 = vunpack.c.l.b16 %v1264
        %v1281 = vunpack.c.l.b16 %v1265
        %v1282 = vpack.c.b16 %v1275, %v1274
        %v1283 = vpack.c.b16 %v1277, %v1276
        %v1284 = vpack.c.b16 %v1279, %v1278
        %v1285 = vpack.c.b16 %v1281, %v1280
        %v1291 = vsel %vm1143, %v1256, 0
        %1293 = vmatprep.subr.bf16.mxu0 0
        %1294 = vmatpush1.bf16.msra.mxu0 0
        %1295 = vmatprep.subr.bf16.mxu0 0
        %1296 = vmatpush1.bf16.msra.mxu0 0
        %1297 = vmatprep.subr.bf16.mxu0 0
        %1298 = vmatpush1.bf16.msra.mxu0 0
        %1299 = vmatprep.subr.bf16.mxu0 0
        %1300 = vmatpush1.bf16.msra.mxu0 0
        %1301 = vmatprep.subr.bf16.mxu0 0
        %1302 = vmatpush1.bf16.msra.mxu0 %v1285
        %1303 = vmatprep.subr.bf16.mxu0 0
        %1304 = vmatpush1.bf16.msra.mxu0 %v1284
        %1305 = vmatprep.subr.bf16.mxu0 0
        %1306 = vmatpush1.bf16.msra.mxu0 %v1283
        %1307 = vmatprep.subr.bf16.mxu0 0
        %1308 = vmatpush1.bf16.msra.mxu0 %v1282
        %1309 = vmatprep.subr.bf16.mxu0 0
        %1310 = vmatpush2.bf16.msra.mxu0 0
        %1311 = vmatprep.subr.bf16.mxu0 0
        %1312 = vmatpush2.bf16.msra.mxu0 0
        %1313 = vmatprep.subr.bf16.mxu0 0
        %1314 = vmatpush2.bf16.msra.mxu0 0
        %1315 = vmatprep.subr.bf16.mxu0 0
        %1316 = vmatpush2.bf16.msra.mxu0 0
        %1317 = vmatprep.subr.bf16.mxu0 0
        %1318 = vmatpush2.bf16.msra.mxu0 0
        %1319 = vmatprep.subr.bf16.mxu0 0
        %1320 = vmatpush2.bf16.msra.mxu0 0
        %1321 = vmatprep.subr.bf16.mxu0 0
        %1322 = vmatpush2.bf16.msra.mxu0 0
        %1323 = vmatprep.subr.bf16.mxu0 0
        %1324 = vmatpush2.bf16.msra.mxu0 0
        %1325 = vmatprep.mubr.bf16.mxu0 0
        %1326 = vmatmul.mubr.bf16.gmra.mxu0 %v1291
        %v1327 = vpop.f32.mrf.mxu0
        %v1328 = vadd.f32 0.0, %v1327
        %v1329 = vpop.f32.mrf.mxu0
        %v1330 = vpop.f32.mrf.mxu0
        %v1331 = vpop.f32.mrf.mxu0
        %1332 = vdwg.mxu0
        %v1333 = vadd.f32 %v1249, %v1328
        %v1334 = vld [vmem:[%s11] sm:$0x1]
        %v1336 = vlaneseq
        %v1337 = vshrl.u32 %v1336, 7
        %v1338 = vsub.s32 0, %v1337
        %v1339 = vrot.slane %v1334, %v1338
        %v1341 = vadd.f32 %v1333, %v1339
        %v1342 = vadd.f32 %v1341, %v889
        %v1343 = vld [vmem:[%s12] sm:$0x1]
        %v1344 = vld [vmem:[%s13] sm:$0x1]
        %v1345 = vsel %vm478, %v1342, 0.0
        %1346 = vadd.xlane.f32.xlu0 %v1345
        %v1347 = vpop.xlane.xlu0 %1346
        %v1348 = vmul.f32 %v1347, %v865
        %v1349 = vsub.f32 %v1342, %v1348
        %v1350 = vmul.f32 %v1349, %v1349
        %v1351 = vsel %vm478, %v1350, 0.0
        %1352 = vadd.xlane.f32.xlu0 %v1351
        %v1353 = vpop.xlane.xlu0 %1352
        %v1354 = vmul.f32 %v1353, %v865
        %v1355 = vadd.f32 %v1354, 1e-05
        %v1356 = vrsqrt.pop %v1355
        %v1357 = vmul.f32 %v1349, %v1356
        %v1359 = vlaneseq
        %v1360 = vshrl.u32 %v1359, 7
        %v1361 = vsub.s32 0, %v1360
        %v1362 = vrot.slane %v1343, %v1361
        %v1364 = vmul.f32 %v1357, %v1362
        %v1366 = vlaneseq
        %v1367 = vshrl.u32 %v1366, 7
        %v1368 = vsub.s32 0, %v1367
        %v1369 = vrot.slane %v1344, %v1368
        %v1371 = vadd.f32 %v1364, %v1369
        %1372 = vst.msk [vmem:[%s438] sm:$0xff] %vm478, %v1371
        %s1373 = sand.u32 %s320, 1
        %s1374 = scalar_lea.sflag [#allocation5], %s1373
        %s1375 = sand.u32 %s320, 1
        %s1376 = smul.addr %s1375, 8
        %s1377 = scalar_lea.vmem [#allocation4], %s1376
        // Predicated region
        $region73: #{tpu_custom_call.1} parent=71 // pred_check
          %p1378 = pneg %p330
        $region74: #{tpu_custom_call.1} parent=71 // pred_check_branch
          %1380 = sbr.rel (%p1378) target = $region76
        $region75: #{tpu_custom_call.1} parent=71 // pred_region
          %s1382 = ssub.s32 128, 128
          %1383 = vsyncadd %s1374, %s1382
          %s1384 = smul.addr %s34, 128
          %s1385 = scalar_lea.hbm %s14, %s1384
          %s1387 = sshll.u32 %s1377, 4
          %s1388 = int_to_ptr.vmem [resolvable:$true] %s1387
          %1390 = dma.vmem_to_hbm [thread:$0]  %s1388, 128, %s1385, %s1374
        $region76: #{tpu_custom_call.1} parent=71 // pred_fallthru
          _
      $region72: #{tpu_custom_call.1} parent=5 // pred_fallthru
        _
      %p1391 = scmp.le.s32.totalorder 2, %s29
      // Predicated region
      $region77: #{tpu_custom_call.1} parent=5 // pred_check
        %p1392 = pneg %p1391
      $region78: #{tpu_custom_call.1} parent=5 // pred_check_branch
        %1394 = sbr.rel (%p1392) target = $region80
      $region79: #{tpu_custom_call.1} parent=5 // pred_region
        %s1395 = ssub.s32 %s29, 2
        // Predicated region
        $region81: #{tpu_custom_call.1} parent=79 // pred_check
          %p1396 = pneg %p336
        $region82: #{tpu_custom_call.1} parent=79 // pred_check_branch
          %1398 = sbr.rel (%p1396) target = $region84
        $region83: #{tpu_custom_call.1} parent=79 // pred_region
          %s1399 = sand.u32 %s321, 1
          %s1400 = scalar_lea.sflag [#allocation5], %s1399
          %s1401 = sand.u32 %s321, 1
          %s1402 = smul.addr %s1401, 8
          %s1403 = scalar_lea.vmem [#allocation4], %s1402
          %1404 = dma.done %s1400, 128
        $region84: #{tpu_custom_call.1} parent=79 // pred_fallthru
          _
      $region80: #{tpu_custom_call.1} parent=5 // pred_fallthru
        _
    $region6: #{tpu_custom_call.1} parent=1 // loop_footer
      %s33 = sadd.s32 1, %s29
    $region7: #{tpu_custom_call.1} parent=1 // loop_footer_branch
      %28 = sbr.rel target = $region3
    $region8: #{tpu_custom_call.1} parent=1 // loop_exit
      _
    %1405 = vsyncpa [#allocation5], 1
    %s1406 = scalar_lea.sflag [#allocation5], 1
    %1407 = vsyncpa %s1406, 1

</llo_original>
